<compile_context>
chip_gen: v6e
topology: v6e:2x2x1
jax: 0.10.0
libtpu: 0.0.40
codegen_flags: <defaults>
</compile_context>

<pallas_src>
import jax
import jax.numpy as jnp
import numpy as np
from jax.experimental import pallas as pl
from jax.experimental.pallas import tpu as pltpu

KSIZE = 7
PAD = KSIZE // 2  # 3 -> 'same' padding, matches nn.Conv2d(2, 1, 7, padding=3)


def spatial_attention_kernel(w_ref, x_ref, out_ref, pad_ref):
    # w_ref  : SMEM (2*KSIZE*KSIZE,) f32   -- conv weight, [in_ch, kh, kw] flat
    # x_ref  : VMEM (1, C, H, W)           -- one input sample
    # out_ref: VMEM (1, 1, H, W)
    # pad_ref: VMEM (2, H+2*PAD, W+2*PAD)  -- zero-padded {avg, max} planes
    x = x_ref[0]                                   # (C, H, W)
    c, h, w = x.shape

    # ---- channel-wise mean & max: contiguous slice reductions (no masks) ----
    s = x[0]
    m = x[0]
    for ci in range(1, c):
        s = s + x[ci]
        m = jnp.maximum(m, x[ci])
    avg = s * (1.0 / c)

    # ---- stage into zero-padded VMEM scratch (halo handled on-chip) ----
    pad_ref[...] = jnp.zeros_like(pad_ref)
    pad_ref[0, PAD:PAD + h, PAD:PAD + w] = avg
    pad_ref[1, PAD:PAD + h, PAD:PAD + w] = m

    # ---- 7x7 conv (2 -> 1 channel, no bias) as 98 shifted FMAs ----
    # Column (lane) shifts hoisted: one sliced load per (channel, kj), reused
    # across the 7 row taps.
    acc = jnp.zeros((h, w), jnp.float32)
    for ci in range(2):
        for kj in range(KSIZE):
            col = pad_ref[ci, :, kj:kj + w]        # (H + 2*PAD, W)
            for ki in range(KSIZE):
                wk = w_ref[ci * KSIZE * KSIZE + ki * KSIZE + kj]  # SMEM scalar
                acc = acc + col[ki:ki + h, :] * wk

    out_ref[0, 0] = 1.0 / (1.0 + jnp.exp(-acc))    # sigmoid (exp on EUP)


def _ceil_to(v, m):
    return -(-v // m) * m


def _vreg_padded_bytes(shape, itemsize=4):
    s = list(shape)
    s[-1] = _ceil_to(s[-1], 128)
    if len(s) >= 2:
        s[-2] = _ceil_to(s[-2], 8)
    n = 1
    for d in s:
        n *= d
    return n * itemsize


@jax.jit
def spatial_attention(x, conv_w):
    # x: (B, C, H, W) f32 (PyTorch NCHW); conv_w: (1, 2, KSIZE, KSIZE) f32.
    b, c, h, w = x.shape
    w_flat = conv_w.reshape(-1).astype(jnp.float32)   # (2*49,) -> SMEM table

    hp, wp = h + 2 * PAD, w + 2 * PAD
    vmem_bytes = (2 * _vreg_padded_bytes((c, h, w))      # double-buffered input
                  + 2 * _vreg_padded_bytes((h, w))       # double-buffered output
                  + 2 * _vreg_padded_bytes((hp, wp))     # padded scratch planes
                  + 8 * _vreg_padded_bytes((h, w))       # live f32 temporaries
                  + (2 << 20))                           # headroom
    vmem_bytes = int(max(16 << 20, min(vmem_bytes, 64 << 20)))

    grid_spec = pltpu.PrefetchScalarGridSpec(
        num_scalar_prefetch=0,
        grid=(b,),
        in_specs=[
            pl.BlockSpec(memory_space=pltpu.MemorySpace.SMEM),     # conv weights
            pl.BlockSpec((1, c, h, w), lambda i: (i, 0, 0, 0)),    # x sample
        ],
        out_specs=pl.BlockSpec((1, 1, h, w), lambda i: (i, 0, 0, 0)),
        scratch_shapes=[pltpu.VMEM((2, hp, wp), jnp.float32)],
    )
    return pl.pallas_call(
        spatial_attention_kernel,
        out_shape=jax.ShapeDtypeStruct((b, 1, h, w), jnp.float32),
        grid_spec=grid_spec,
        compiler_params=pltpu.CompilerParams(
            dimension_semantics=("parallel",),
            vmem_limit_bytes=vmem_bytes),
    )(w_flat, x)


def reference(x, conv_w):
    # Pure-JAX (XLA) reference matching the PyTorch forward exactly.
    avg = jnp.mean(x, axis=1, keepdims=True)
    mx = jnp.max(x, axis=1, keepdims=True)
    cat = jnp.concatenate([avg, mx], axis=1)          # (B, 2, H, W)
    y = jax.lax.conv_general_dilated(
        cat, conv_w, window_strides=(1, 1),
        padding=[(PAD, PAD), (PAD, PAD)],
        dimension_numbers=("NCHW", "OIHW", "NCHW"))
    return jax.nn.sigmoid(y)


if __name__ == "__main__":
    B, C, H, W = 2, 4, 16, 16
    key = jax.random.PRNGKey(0)
    kx, kw = jax.random.split(key)

    x = jax.random.normal(kx, (B, C, H, W), jnp.float32)        # NCHW, like PyTorch
    conv_w = 0.3 * jax.random.normal(kw, (1, 2, KSIZE, KSIZE), jnp.float32)

    out = jax.block_until_ready(spatial_attention(x, conv_w))
    ref = jax.block_until_ready(reference(x, conv_w))

    np.testing.assert_allclose(np.asarray(out), np.asarray(ref),
                               rtol=1e-4, atol=1e-4)
    print("KERNEL_OK")
</pallas_src>

<mosaic_0001>
module attributes {stable_mosaic.version = 11 : i64} {
  func.func @spatial_attention_kernel(%arg0: i32, %arg1: memref<98xf32, #tpu.memory_space<smem>>, %arg2: memref<1x4x16x16xf32, #tpu.memory_space<vmem>>, %arg3: memref<1x1x16x16xf32, #tpu.memory_space<vmem>>, %arg4: memref<2x22x22xf32, #tpu.memory_space<vmem>>) attributes {dimension_semantics = [#tpu.dimension_semantics<parallel>], iteration_bounds = array<i64: 2>, scalar_prefetch = 0 : i64, scratch_operands = 1 : i64, tpu.core_type = #tpu.core_type<tc>, window_params = [{transform_indices = @transform_0, window_bounds = array<i64: 98>}, {transform_indices = @transform_1, window_bounds = array<i64: 1, 4, 16, 16>}, {transform_indices = @transform_2, window_bounds = array<i64: 1, 1, 16, 16>}]} {
    %c0 = arith.constant 0 : index
    %c0_0 = arith.constant 0 : index
    %c0_1 = arith.constant 0 : index
    %c0_2 = arith.constant 0 : index
    %0 = vector.load %arg2[%c0, %c0_0, %c0_1, %c0_2] : memref<1x4x16x16xf32, #tpu.memory_space<vmem>>, vector<1x4x16x16xf32>
    %1 = vector.shape_cast %0 : vector<1x4x16x16xf32> to vector<4x16x16xf32>
    %2 = vector.extract_strided_slice %1 {offsets = [0, 0, 0], sizes = [1, 16, 16], strides = [1, 1, 1]} : vector<4x16x16xf32> to vector<1x16x16xf32>
    %3 = vector.shape_cast %2 : vector<1x16x16xf32> to vector<16x16xf32>
    %4 = vector.extract_strided_slice %1 {offsets = [0, 0, 0], sizes = [1, 16, 16], strides = [1, 1, 1]} : vector<4x16x16xf32> to vector<1x16x16xf32>
    %5 = vector.shape_cast %4 : vector<1x16x16xf32> to vector<16x16xf32>
    %6 = vector.extract_strided_slice %1 {offsets = [1, 0, 0], sizes = [1, 16, 16], strides = [1, 1, 1]} : vector<4x16x16xf32> to vector<1x16x16xf32>
    %7 = vector.shape_cast %6 : vector<1x16x16xf32> to vector<16x16xf32>
    %8 = arith.addf %3, %7 : vector<16x16xf32>
    %9 = vector.extract_strided_slice %1 {offsets = [1, 0, 0], sizes = [1, 16, 16], strides = [1, 1, 1]} : vector<4x16x16xf32> to vector<1x16x16xf32>
    %10 = vector.shape_cast %9 : vector<1x16x16xf32> to vector<16x16xf32>
    %11 = arith.maximumf %5, %10 : vector<16x16xf32>
    %12 = vector.extract_strided_slice %1 {offsets = [2, 0, 0], sizes = [1, 16, 16], strides = [1, 1, 1]} : vector<4x16x16xf32> to vector<1x16x16xf32>
    %13 = vector.shape_cast %12 : vector<1x16x16xf32> to vector<16x16xf32>
    %14 = arith.addf %8, %13 : vector<16x16xf32>
    %15 = vector.extract_strided_slice %1 {offsets = [2, 0, 0], sizes = [1, 16, 16], strides = [1, 1, 1]} : vector<4x16x16xf32> to vector<1x16x16xf32>
    %16 = vector.shape_cast %15 : vector<1x16x16xf32> to vector<16x16xf32>
    %17 = arith.maximumf %11, %16 : vector<16x16xf32>
    %18 = vector.extract_strided_slice %1 {offsets = [3, 0, 0], sizes = [1, 16, 16], strides = [1, 1, 1]} : vector<4x16x16xf32> to vector<1x16x16xf32>
    %19 = vector.shape_cast %18 : vector<1x16x16xf32> to vector<16x16xf32>
    %20 = arith.addf %14, %19 : vector<16x16xf32>
    %21 = vector.extract_strided_slice %1 {offsets = [3, 0, 0], sizes = [1, 16, 16], strides = [1, 1, 1]} : vector<4x16x16xf32> to vector<1x16x16xf32>
    %22 = vector.shape_cast %21 : vector<1x16x16xf32> to vector<16x16xf32>
    %23 = arith.maximumf %17, %22 : vector<16x16xf32>
    %cst = arith.constant 2.500000e-01 : f32
    %24 = vector.broadcast %cst : f32 to vector<16x16xf32>
    %25 = arith.mulf %20, %24 : vector<16x16xf32>
    %cst_3 = arith.constant 0.000000e+00 : f32
    %26 = vector.broadcast %cst_3 : f32 to vector<2x22x22xf32>
    %c0_4 = arith.constant 0 : index
    %c0_5 = arith.constant 0 : index
    %c0_6 = arith.constant 0 : index
    %27 = vector.load %arg4[%c0_4, %c0_5, %c0_6] : memref<2x22x22xf32, #tpu.memory_space<vmem>>, vector<2x22x22xf32>
    tpu.vector_store %arg4[%c0_4, %c0_5, %c0_6], %26 {strides = array<i32>} : memref<2x22x22xf32, #tpu.memory_space<vmem>>, vector<2x22x22xf32>,
    %c0_7 = arith.constant 0 : index
    %c3 = arith.constant 3 : index
    %c3_8 = arith.constant 3 : index
    %28 = vector.load %arg4[%c0_7, %c3, %c3_8] : memref<2x22x22xf32, #tpu.memory_space<vmem>>, vector<1x16x16xf32>
    %29 = vector.shape_cast %28 : vector<1x16x16xf32> to vector<16x16xf32>
    %30 = vector.shape_cast %25 : vector<16x16xf32> to vector<1x16x16xf32>
    tpu.vector_store %arg4[%c0_7, %c3, %c3_8], %30 {strides = array<i32>} : memref<2x22x22xf32, #tpu.memory_space<vmem>>, vector<1x16x16xf32>,
    %c1 = arith.constant 1 : index
    %c3_9 = arith.constant 3 : index
    %c3_10 = arith.constant 3 : index
    %31 = vector.load %arg4[%c1, %c3_9, %c3_10] : memref<2x22x22xf32, #tpu.memory_space<vmem>>, vector<1x16x16xf32>
    %32 = vector.shape_cast %31 : vector<1x16x16xf32> to vector<16x16xf32>
    %33 = vector.shape_cast %23 : vector<16x16xf32> to vector<1x16x16xf32>
    tpu.vector_store %arg4[%c1, %c3_9, %c3_10], %33 {strides = array<i32>} : memref<2x22x22xf32, #tpu.memory_space<vmem>>, vector<1x16x16xf32>,
    %cst_11 = arith.constant 0.000000e+00 : f32
    %34 = vector.broadcast %cst_11 : f32 to vector<16x16xf32>
    %c0_12 = arith.constant 0 : index
    %c0_13 = arith.constant 0 : index
    %c0_14 = arith.constant 0 : index
    %35 = vector.load %arg4[%c0_12, %c0_13, %c0_14] : memref<2x22x22xf32, #tpu.memory_space<vmem>>, vector<1x22x16xf32>
    %36 = vector.shape_cast %35 : vector<1x22x16xf32> to vector<22x16xf32>
    %c0_15 = arith.constant 0 : index
    %37 = memref.load %arg1[%c0_15] : memref<98xf32, #tpu.memory_space<smem>>
    %38 = vector.extract_strided_slice %36 {offsets = [0, 0], sizes = [16, 16], strides = [1, 1]} : vector<22x16xf32> to vector<16x16xf32>
    %39 = vector.broadcast %37 : f32 to vector<16x16xf32>
    %40 = arith.mulf %38, %39 : vector<16x16xf32>
    %41 = arith.addf %34, %40 : vector<16x16xf32>
    %c7 = arith.constant 7 : index
    %42 = memref.load %arg1[%c7] : memref<98xf32, #tpu.memory_space<smem>>
    %43 = vector.extract_strided_slice %36 {offsets = [1, 0], sizes = [16, 16], strides = [1, 1]} : vector<22x16xf32> to vector<16x16xf32>
    %44 = vector.broadcast %42 : f32 to vector<16x16xf32>
    %45 = arith.mulf %43, %44 : vector<16x16xf32>
    %46 = arith.addf %41, %45 : vector<16x16xf32>
    %c14 = arith.constant 14 : index
    %47 = memref.load %arg1[%c14] : memref<98xf32, #tpu.memory_space<smem>>
    %48 = vector.extract_strided_slice %36 {offsets = [2, 0], sizes = [16, 16], strides = [1, 1]} : vector<22x16xf32> to vector<16x16xf32>
    %49 = vector.broadcast %47 : f32 to vector<16x16xf32>
    %50 = arith.mulf %48, %49 : vector<16x16xf32>
    %51 = arith.addf %46, %50 : vector<16x16xf32>
    %c21 = arith.constant 21 : index
    %52 = memref.load %arg1[%c21] : memref<98xf32, #tpu.memory_space<smem>>
    %53 = vector.extract_strided_slice %36 {offsets = [3, 0], sizes = [16, 16], strides = [1, 1]} : vector<22x16xf32> to vector<16x16xf32>
    %54 = vector.broadcast %52 : f32 to vector<16x16xf32>
    %55 = arith.mulf %53, %54 : vector<16x16xf32>
    %56 = arith.addf %51, %55 : vector<16x16xf32>
    %c28 = arith.constant 28 : index
    %57 = memref.load %arg1[%c28] : memref<98xf32, #tpu.memory_space<smem>>
    %58 = vector.extract_strided_slice %36 {offsets = [4, 0], sizes = [16, 16], strides = [1, 1]} : vector<22x16xf32> to vector<16x16xf32>
    %59 = vector.broadcast %57 : f32 to vector<16x16xf32>
    %60 = arith.mulf %58, %59 : vector<16x16xf32>
    %61 = arith.addf %56, %60 : vector<16x16xf32>
    %c35 = arith.constant 35 : index
    %62 = memref.load %arg1[%c35] : memref<98xf32, #tpu.memory_space<smem>>
    %63 = vector.extract_strided_slice %36 {offsets = [5, 0], sizes = [16, 16], strides = [1, 1]} : vector<22x16xf32> to vector<16x16xf32>
    %64 = vector.broadcast %62 : f32 to vector<16x16xf32>
    %65 = arith.mulf %63, %64 : vector<16x16xf32>
    %66 = arith.addf %61, %65 : vector<16x16xf32>
    %c42 = arith.constant 42 : index
    %67 = memref.load %arg1[%c42] : memref<98xf32, #tpu.memory_space<smem>>
    %68 = vector.extract_strided_slice %36 {offsets = [6, 0], sizes = [16, 16], strides = [1, 1]} : vector<22x16xf32> to vector<16x16xf32>
    %69 = vector.broadcast %67 : f32 to vector<16x16xf32>
    %70 = arith.mulf %68, %69 : vector<16x16xf32>
    %71 = arith.addf %66, %70 : vector<16x16xf32>
    %c0_16 = arith.constant 0 : index
    %c0_17 = arith.constant 0 : index
    %c1_18 = arith.constant 1 : index
    %72 = vector.load %arg4[%c0_16, %c0_17, %c1_18] : memref<2x22x22xf32, #tpu.memory_space<vmem>>, vector<1x22x16xf32>
    %73 = vector.shape_cast %72 : vector<1x22x16xf32> to vector<22x16xf32>
    %c1_19 = arith.constant 1 : index
    %74 = memref.load %arg1[%c1_19] : memref<98xf32, #tpu.memory_space<smem>>
    %75 = vector.extract_strided_slice %73 {offsets = [0, 0], sizes = [16, 16], strides = [1, 1]} : vector<22x16xf32> to vector<16x16xf32>
    %76 = vector.broadcast %74 : f32 to vector<16x16xf32>
    %77 = arith.mulf %75, %76 : vector<16x16xf32>
    %78 = arith.addf %71, %77 : vector<16x16xf32>
    %c8 = arith.constant 8 : index
    %79 = memref.load %arg1[%c8] : memref<98xf32, #tpu.memory_space<smem>>
    %80 = vector.extract_strided_slice %73 {offsets = [1, 0], sizes = [16, 16], strides = [1, 1]} : vector<22x16xf32> to vector<16x16xf32>
    %81 = vector.broadcast %79 : f32 to vector<16x16xf32>
    %82 = arith.mulf %80, %81 : vector<16x16xf32>
    %83 = arith.addf %78, %82 : vector<16x16xf32>
    %c15 = arith.constant 15 : index
    %84 = memref.load %arg1[%c15] : memref<98xf32, #tpu.memory_space<smem>>
    %85 = vector.extract_strided_slice %73 {offsets = [2, 0], sizes = [16, 16], strides = [1, 1]} : vector<22x16xf32> to vector<16x16xf32>
    %86 = vector.broadcast %84 : f32 to vector<16x16xf32>
    %87 = arith.mulf %85, %86 : vector<16x16xf32>
    %88 = arith.addf %83, %87 : vector<16x16xf32>
    %c22 = arith.constant 22 : index
    %89 = memref.load %arg1[%c22] : memref<98xf32, #tpu.memory_space<smem>>
    %90 = vector.extract_strided_slice %73 {offsets = [3, 0], sizes = [16, 16], strides = [1, 1]} : vector<22x16xf32> to vector<16x16xf32>
    %91 = vector.broadcast %89 : f32 to vector<16x16xf32>
    %92 = arith.mulf %90, %91 : vector<16x16xf32>
    %93 = arith.addf %88, %92 : vector<16x16xf32>
    %c29 = arith.constant 29 : index
    %94 = memref.load %arg1[%c29] : memref<98xf32, #tpu.memory_space<smem>>
    %95 = vector.extract_strided_slice %73 {offsets = [4, 0], sizes = [16, 16], strides = [1, 1]} : vector<22x16xf32> to vector<16x16xf32>
    %96 = vector.broadcast %94 : f32 to vector<16x16xf32>
    %97 = arith.mulf %95, %96 : vector<16x16xf32>
    %98 = arith.addf %93, %97 : vector<16x16xf32>
    %c36 = arith.constant 36 : index
    %99 = memref.load %arg1[%c36] : memref<98xf32, #tpu.memory_space<smem>>
    %100 = vector.extract_strided_slice %73 {offsets = [5, 0], sizes = [16, 16], strides = [1, 1]} : vector<22x16xf32> to vector<16x16xf32>
    %101 = vector.broadcast %99 : f32 to vector<16x16xf32>
    %102 = arith.mulf %100, %101 : vector<16x16xf32>
    %103 = arith.addf %98, %102 : vector<16x16xf32>
    %c43 = arith.constant 43 : index
    %104 = memref.load %arg1[%c43] : memref<98xf32, #tpu.memory_space<smem>>
    %105 = vector.extract_strided_slice %73 {offsets = [6, 0], sizes = [16, 16], strides = [1, 1]} : vector<22x16xf32> to vector<16x16xf32>
    %106 = vector.broadcast %104 : f32 to vector<16x16xf32>
    %107 = arith.mulf %105, %106 : vector<16x16xf32>
    %108 = arith.addf %103, %107 : vector<16x16xf32>
    %c0_20 = arith.constant 0 : index
    %c0_21 = arith.constant 0 : index
    %c2 = arith.constant 2 : index
    %109 = vector.load %arg4[%c0_20, %c0_21, %c2] : memref<2x22x22xf32, #tpu.memory_space<vmem>>, vector<1x22x16xf32>
    %110 = vector.shape_cast %109 : vector<1x22x16xf32> to vector<22x16xf32>
    %c2_22 = arith.constant 2 : index
    %111 = memref.load %arg1[%c2_22] : memref<98xf32, #tpu.memory_space<smem>>
    %112 = vector.extract_strided_slice %110 {offsets = [0, 0], sizes = [16, 16], strides = [1, 1]} : vector<22x16xf32> to vector<16x16xf32>
    %113 = vector.broadcast %111 : f32 to vector<16x16xf32>
    %114 = arith.mulf %112, %113 : vector<16x16xf32>
    %115 = arith.addf %108, %114 : vector<16x16xf32>
    %c9 = arith.constant 9 : index
    %116 = memref.load %arg1[%c9] : memref<98xf32, #tpu.memory_space<smem>>
    %117 = vector.extract_strided_slice %110 {offsets = [1, 0], sizes = [16, 16], strides = [1, 1]} : vector<22x16xf32> to vector<16x16xf32>
    %118 = vector.broadcast %116 : f32 to vector<16x16xf32>
    %119 = arith.mulf %117, %118 : vector<16x16xf32>
    %120 = arith.addf %115, %119 : vector<16x16xf32>
    %c16 = arith.constant 16 : index
    %121 = memref.load %arg1[%c16] : memref<98xf32, #tpu.memory_space<smem>>
    %122 = vector.extract_strided_slice %110 {offsets = [2, 0], sizes = [16, 16], strides = [1, 1]} : vector<22x16xf32> to vector<16x16xf32>
    %123 = vector.broadcast %121 : f32 to vector<16x16xf32>
    %124 = arith.mulf %122, %123 : vector<16x16xf32>
    %125 = arith.addf %120, %124 : vector<16x16xf32>
    %c23 = arith.constant 23 : index
    %126 = memref.load %arg1[%c23] : memref<98xf32, #tpu.memory_space<smem>>
    %127 = vector.extract_strided_slice %110 {offsets = [3, 0], sizes = [16, 16], strides = [1, 1]} : vector<22x16xf32> to vector<16x16xf32>
    %128 = vector.broadcast %126 : f32 to vector<16x16xf32>
    %129 = arith.mulf %127, %128 : vector<16x16xf32>
    %130 = arith.addf %125, %129 : vector<16x16xf32>
    %c30 = arith.constant 30 : index
    %131 = memref.load %arg1[%c30] : memref<98xf32, #tpu.memory_space<smem>>
    %132 = vector.extract_strided_slice %110 {offsets = [4, 0], sizes = [16, 16], strides = [1, 1]} : vector<22x16xf32> to vector<16x16xf32>
    %133 = vector.broadcast %131 : f32 to vector<16x16xf32>
    %134 = arith.mulf %132, %133 : vector<16x16xf32>
    %135 = arith.addf %130, %134 : vector<16x16xf32>
    %c37 = arith.constant 37 : index
    %136 = memref.load %arg1[%c37] : memref<98xf32, #tpu.memory_space<smem>>
    %137 = vector.extract_strided_slice %110 {offsets = [5, 0], sizes = [16, 16], strides = [1, 1]} : vector<22x16xf32> to vector<16x16xf32>
    %138 = vector.broadcast %136 : f32 to vector<16x16xf32>
    %139 = arith.mulf %137, %138 : vector<16x16xf32>
    %140 = arith.addf %135, %139 : vector<16x16xf32>
    %c44 = arith.constant 44 : index
    %141 = memref.load %arg1[%c44] : memref<98xf32, #tpu.memory_space<smem>>
    %142 = vector.extract_strided_slice %110 {offsets = [6, 0], sizes = [16, 16], strides = [1, 1]} : vector<22x16xf32> to vector<16x16xf32>
    %143 = vector.broadcast %141 : f32 to vector<16x16xf32>
    %144 = arith.mulf %142, %143 : vector<16x16xf32>
    %145 = arith.addf %140, %144 : vector<16x16xf32>
    %c0_23 = arith.constant 0 : index
    %c0_24 = arith.constant 0 : index
    %c3_25 = arith.constant 3 : index
    %146 = vector.load %arg4[%c0_23, %c0_24, %c3_25] : memref<2x22x22xf32, #tpu.memory_space<vmem>>, vector<1x22x16xf32>
    %147 = vector.shape_cast %146 : vector<1x22x16xf32> to vector<22x16xf32>
    %c3_26 = arith.constant 3 : index
    %148 = memref.load %arg1[%c3_26] : memref<98xf32, #tpu.memory_space<smem>>
    %149 = vector.extract_strided_slice %147 {offsets = [0, 0], sizes = [16, 16], strides = [1, 1]} : vector<22x16xf32> to vector<16x16xf32>
    %150 = vector.broadcast %148 : f32 to vector<16x16xf32>
    %151 = arith.mulf %149, %150 : vector<16x16xf32>
    %152 = arith.addf %145, %151 : vector<16x16xf32>
    %c10 = arith.constant 10 : index
    %153 = memref.load %arg1[%c10] : memref<98xf32, #tpu.memory_space<smem>>
    %154 = vector.extract_strided_slice %147 {offsets = [1, 0], sizes = [16, 16], strides = [1, 1]} : vector<22x16xf32> to vector<16x16xf32>
    %155 = vector.broadcast %153 : f32 to vector<16x16xf32>
    %156 = arith.mulf %154, %155 : vector<16x16xf32>
    %157 = arith.addf %152, %156 : vector<16x16xf32>
    %c17 = arith.constant 17 : index
    %158 = memref.load %arg1[%c17] : memref<98xf32, #tpu.memory_space<smem>>
    %159 = vector.extract_strided_slice %147 {offsets = [2, 0], sizes = [16, 16], strides = [1, 1]} : vector<22x16xf32> to vector<16x16xf32>
    %160 = vector.broadcast %158 : f32 to vector<16x16xf32>
    %161 = arith.mulf %159, %160 : vector<16x16xf32>
    %162 = arith.addf %157, %161 : vector<16x16xf32>
    %c24 = arith.constant 24 : index
    %163 = memref.load %arg1[%c24] : memref<98xf32, #tpu.memory_space<smem>>
    %164 = vector.extract_strided_slice %147 {offsets = [3, 0], sizes = [16, 16], strides = [1, 1]} : vector<22x16xf32> to vector<16x16xf32>
    %165 = vector.broadcast %163 : f32 to vector<16x16xf32>
    %166 = arith.mulf %164, %165 : vector<16x16xf32>
    %167 = arith.addf %162, %166 : vector<16x16xf32>
    %c31 = arith.constant 31 : index
    %168 = memref.load %arg1[%c31] : memref<98xf32, #tpu.memory_space<smem>>
    %169 = vector.extract_strided_slice %147 {offsets = [4, 0], sizes = [16, 16], strides = [1, 1]} : vector<22x16xf32> to vector<16x16xf32>
    %170 = vector.broadcast %168 : f32 to vector<16x16xf32>
    %171 = arith.mulf %169, %170 : vector<16x16xf32>
    %172 = arith.addf %167, %171 : vector<16x16xf32>
    %c38 = arith.constant 38 : index
    %173 = memref.load %arg1[%c38] : memref<98xf32, #tpu.memory_space<smem>>
    %174 = vector.extract_strided_slice %147 {offsets = [5, 0], sizes = [16, 16], strides = [1, 1]} : vector<22x16xf32> to vector<16x16xf32>
    %175 = vector.broadcast %173 : f32 to vector<16x16xf32>
    %176 = arith.mulf %174, %175 : vector<16x16xf32>
    %177 = arith.addf %172, %176 : vector<16x16xf32>
    %c45 = arith.constant 45 : index
    %178 = memref.load %arg1[%c45] : memref<98xf32, #tpu.memory_space<smem>>
    %179 = vector.extract_strided_slice %147 {offsets = [6, 0], sizes = [16, 16], strides = [1, 1]} : vector<22x16xf32> to vector<16x16xf32>
    %180 = vector.broadcast %178 : f32 to vector<16x16xf32>
    %181 = arith.mulf %179, %180 : vector<16x16xf32>
    %182 = arith.addf %177, %181 : vector<16x16xf32>
    %c0_27 = arith.constant 0 : index
    %c0_28 = arith.constant 0 : index
    %c4 = arith.constant 4 : index
    %183 = vector.load %arg4[%c0_27, %c0_28, %c4] : memref<2x22x22xf32, #tpu.memory_space<vmem>>, vector<1x22x16xf32>
    %184 = vector.shape_cast %183 : vector<1x22x16xf32> to vector<22x16xf32>
    %c4_29 = arith.constant 4 : index
    %185 = memref.load %arg1[%c4_29] : memref<98xf32, #tpu.memory_space<smem>>
    %186 = vector.extract_strided_slice %184 {offsets = [0, 0], sizes = [16, 16], strides = [1, 1]} : vector<22x16xf32> to vector<16x16xf32>
    %187 = vector.broadcast %185 : f32 to vector<16x16xf32>
    %188 = arith.mulf %186, %187 : vector<16x16xf32>
    %189 = arith.addf %182, %188 : vector<16x16xf32>
    %c11 = arith.constant 11 : index
    %190 = memref.load %arg1[%c11] : memref<98xf32, #tpu.memory_space<smem>>
    %191 = vector.extract_strided_slice %184 {offsets = [1, 0], sizes = [16, 16], strides = [1, 1]} : vector<22x16xf32> to vector<16x16xf32>
    %192 = vector.broadcast %190 : f32 to vector<16x16xf32>
    %193 = arith.mulf %191, %192 : vector<16x16xf32>
    %194 = arith.addf %189, %193 : vector<16x16xf32>
    %c18 = arith.constant 18 : index
    %195 = memref.load %arg1[%c18] : memref<98xf32, #tpu.memory_space<smem>>
    %196 = vector.extract_strided_slice %184 {offsets = [2, 0], sizes = [16, 16], strides = [1, 1]} : vector<22x16xf32> to vector<16x16xf32>
    %197 = vector.broadcast %195 : f32 to vector<16x16xf32>
    %198 = arith.mulf %196, %197 : vector<16x16xf32>
    %199 = arith.addf %194, %198 : vector<16x16xf32>
    %c25 = arith.constant 25 : index
    %200 = memref.load %arg1[%c25] : memref<98xf32, #tpu.memory_space<smem>>
    %201 = vector.extract_strided_slice %184 {offsets = [3, 0], sizes = [16, 16], strides = [1, 1]} : vector<22x16xf32> to vector<16x16xf32>
    %202 = vector.broadcast %200 : f32 to vector<16x16xf32>
    %203 = arith.mulf %201, %202 : vector<16x16xf32>
    %204 = arith.addf %199, %203 : vector<16x16xf32>
    %c32 = arith.constant 32 : index
    %205 = memref.load %arg1[%c32] : memref<98xf32, #tpu.memory_space<smem>>
    %206 = vector.extract_strided_slice %184 {offsets = [4, 0], sizes = [16, 16], strides = [1, 1]} : vector<22x16xf32> to vector<16x16xf32>
    %207 = vector.broadcast %205 : f32 to vector<16x16xf32>
    %208 = arith.mulf %206, %207 : vector<16x16xf32>
    %209 = arith.addf %204, %208 : vector<16x16xf32>
    %c39 = arith.constant 39 : index
    %210 = memref.load %arg1[%c39] : memref<98xf32, #tpu.memory_space<smem>>
    %211 = vector.extract_strided_slice %184 {offsets = [5, 0], sizes = [16, 16], strides = [1, 1]} : vector<22x16xf32> to vector<16x16xf32>
    %212 = vector.broadcast %210 : f32 to vector<16x16xf32>
    %213 = arith.mulf %211, %212 : vector<16x16xf32>
    %214 = arith.addf %209, %213 : vector<16x16xf32>
    %c46 = arith.constant 46 : index
    %215 = memref.load %arg1[%c46] : memref<98xf32, #tpu.memory_space<smem>>
    %216 = vector.extract_strided_slice %184 {offsets = [6, 0], sizes = [16, 16], strides = [1, 1]} : vector<22x16xf32> to vector<16x16xf32>
    %217 = vector.broadcast %215 : f32 to vector<16x16xf32>
    %218 = arith.mulf %216, %217 : vector<16x16xf32>
    %219 = arith.addf %214, %218 : vector<16x16xf32>
    %c0_30 = arith.constant 0 : index
    %c0_31 = arith.constant 0 : index
    %c5 = arith.constant 5 : index
    %220 = vector.load %arg4[%c0_30, %c0_31, %c5] : memref<2x22x22xf32, #tpu.memory_space<vmem>>, vector<1x22x16xf32>
    %221 = vector.shape_cast %220 : vector<1x22x16xf32> to vector<22x16xf32>
    %c5_32 = arith.constant 5 : index
    %222 = memref.load %arg1[%c5_32] : memref<98xf32, #tpu.memory_space<smem>>
    %223 = vector.extract_strided_slice %221 {offsets = [0, 0], sizes = [16, 16], strides = [1, 1]} : vector<22x16xf32> to vector<16x16xf32>
    %224 = vector.broadcast %222 : f32 to vector<16x16xf32>
    %225 = arith.mulf %223, %224 : vector<16x16xf32>
    %226 = arith.addf %219, %225 : vector<16x16xf32>
    %c12 = arith.constant 12 : index
    %227 = memref.load %arg1[%c12] : memref<98xf32, #tpu.memory_space<smem>>
    %228 = vector.extract_strided_slice %221 {offsets = [1, 0], sizes = [16, 16], strides = [1, 1]} : vector<22x16xf32> to vector<16x16xf32>
    %229 = vector.broadcast %227 : f32 to vector<16x16xf32>
    %230 = arith.mulf %228, %229 : vector<16x16xf32>
    %231 = arith.addf %226, %230 : vector<16x16xf32>
    %c19 = arith.constant 19 : index
    %232 = memref.load %arg1[%c19] : memref<98xf32, #tpu.memory_space<smem>>
    %233 = vector.extract_strided_slice %221 {offsets = [2, 0], sizes = [16, 16], strides = [1, 1]} : vector<22x16xf32> to vector<16x16xf32>
    %234 = vector.broadcast %232 : f32 to vector<16x16xf32>
    %235 = arith.mulf %233, %234 : vector<16x16xf32>
    %236 = arith.addf %231, %235 : vector<16x16xf32>
    %c26 = arith.constant 26 : index
    %237 = memref.load %arg1[%c26] : memref<98xf32, #tpu.memory_space<smem>>
    %238 = vector.extract_strided_slice %221 {offsets = [3, 0], sizes = [16, 16], strides = [1, 1]} : vector<22x16xf32> to vector<16x16xf32>
    %239 = vector.broadcast %237 : f32 to vector<16x16xf32>
    %240 = arith.mulf %238, %239 : vector<16x16xf32>
    %241 = arith.addf %236, %240 : vector<16x16xf32>
    %c33 = arith.constant 33 : index
    %242 = memref.load %arg1[%c33] : memref<98xf32, #tpu.memory_space<smem>>
    %243 = vector.extract_strided_slice %221 {offsets = [4, 0], sizes = [16, 16], strides = [1, 1]} : vector<22x16xf32> to vector<16x16xf32>
    %244 = vector.broadcast %242 : f32 to vector<16x16xf32>
    %245 = arith.mulf %243, %244 : vector<16x16xf32>
    %246 = arith.addf %241, %245 : vector<16x16xf32>
    %c40 = arith.constant 40 : index
    %247 = memref.load %arg1[%c40] : memref<98xf32, #tpu.memory_space<smem>>
    %248 = vector.extract_strided_slice %221 {offsets = [5, 0], sizes = [16, 16], strides = [1, 1]} : vector<22x16xf32> to vector<16x16xf32>
    %249 = vector.broadcast %247 : f32 to vector<16x16xf32>
    %250 = arith.mulf %248, %249 : vector<16x16xf32>
    %251 = arith.addf %246, %250 : vector<16x16xf32>
    %c47 = arith.constant 47 : index
    %252 = memref.load %arg1[%c47] : memref<98xf32, #tpu.memory_space<smem>>
    %253 = vector.extract_strided_slice %221 {offsets = [6, 0], sizes = [16, 16], strides = [1, 1]} : vector<22x16xf32> to vector<16x16xf32>
    %254 = vector.broadcast %252 : f32 to vector<16x16xf32>
    %255 = arith.mulf %253, %254 : vector<16x16xf32>
    %256 = arith.addf %251, %255 : vector<16x16xf32>
    %c0_33 = arith.constant 0 : index
    %c0_34 = arith.constant 0 : index
    %c6 = arith.constant 6 : index
    %257 = vector.load %arg4[%c0_33, %c0_34, %c6] : memref<2x22x22xf32, #tpu.memory_space<vmem>>, vector<1x22x16xf32>
    %258 = vector.shape_cast %257 : vector<1x22x16xf32> to vector<22x16xf32>
    %c6_35 = arith.constant 6 : index
    %259 = memref.load %arg1[%c6_35] : memref<98xf32, #tpu.memory_space<smem>>
    %260 = vector.extract_strided_slice %258 {offsets = [0, 0], sizes = [16, 16], strides = [1, 1]} : vector<22x16xf32> to vector<16x16xf32>
    %261 = vector.broadcast %259 : f32 to vector<16x16xf32>
    %262 = arith.mulf %260, %261 : vector<16x16xf32>
    %263 = arith.addf %256, %262 : vector<16x16xf32>
    %c13 = arith.constant 13 : index
    %264 = memref.load %arg1[%c13] : memref<98xf32, #tpu.memory_space<smem>>
    %265 = vector.extract_strided_slice %258 {offsets = [1, 0], sizes = [16, 16], strides = [1, 1]} : vector<22x16xf32> to vector<16x16xf32>
    %266 = vector.broadcast %264 : f32 to vector<16x16xf32>
    %267 = arith.mulf %265, %266 : vector<16x16xf32>
    %268 = arith.addf %263, %267 : vector<16x16xf32>
    %c20 = arith.constant 20 : index
    %269 = memref.load %arg1[%c20] : memref<98xf32, #tpu.memory_space<smem>>
    %270 = vector.extract_strided_slice %258 {offsets = [2, 0], sizes = [16, 16], strides = [1, 1]} : vector<22x16xf32> to vector<16x16xf32>
    %271 = vector.broadcast %269 : f32 to vector<16x16xf32>
    %272 = arith.mulf %270, %271 : vector<16x16xf32>
    %273 = arith.addf %268, %272 : vector<16x16xf32>
    %c27 = arith.constant 27 : index
    %274 = memref.load %arg1[%c27] : memref<98xf32, #tpu.memory_space<smem>>
    %275 = vector.extract_strided_slice %258 {offsets = [3, 0], sizes = [16, 16], strides = [1, 1]} : vector<22x16xf32> to vector<16x16xf32>
    %276 = vector.broadcast %274 : f32 to vector<16x16xf32>
    %277 = arith.mulf %275, %276 : vector<16x16xf32>
    %278 = arith.addf %273, %277 : vector<16x16xf32>
    %c34 = arith.constant 34 : index
    %279 = memref.load %arg1[%c34] : memref<98xf32, #tpu.memory_space<smem>>
    %280 = vector.extract_strided_slice %258 {offsets = [4, 0], sizes = [16, 16], strides = [1, 1]} : vector<22x16xf32> to vector<16x16xf32>
    %281 = vector.broadcast %279 : f32 to vector<16x16xf32>
    %282 = arith.mulf %280, %281 : vector<16x16xf32>
    %283 = arith.addf %278, %282 : vector<16x16xf32>
    %c41 = arith.constant 41 : index
    %284 = memref.load %arg1[%c41] : memref<98xf32, #tpu.memory_space<smem>>
    %285 = vector.extract_strided_slice %258 {offsets = [5, 0], sizes = [16, 16], strides = [1, 1]} : vector<22x16xf32> to vector<16x16xf32>
    %286 = vector.broadcast %284 : f32 to vector<16x16xf32>
    %287 = arith.mulf %285, %286 : vector<16x16xf32>
    %288 = arith.addf %283, %287 : vector<16x16xf32>
    %c48 = arith.constant 48 : index
    %289 = memref.load %arg1[%c48] : memref<98xf32, #tpu.memory_space<smem>>
    %290 = vector.extract_strided_slice %258 {offsets = [6, 0], sizes = [16, 16], strides = [1, 1]} : vector<22x16xf32> to vector<16x16xf32>
    %291 = vector.broadcast %289 : f32 to vector<16x16xf32>
    %292 = arith.mulf %290, %291 : vector<16x16xf32>
    %293 = arith.addf %288, %292 : vector<16x16xf32>
    %c1_36 = arith.constant 1 : index
    %c0_37 = arith.constant 0 : index
    %c0_38 = arith.constant 0 : index
    %294 = vector.load %arg4[%c1_36, %c0_37, %c0_38] : memref<2x22x22xf32, #tpu.memory_space<vmem>>, vector<1x22x16xf32>
    %295 = vector.shape_cast %294 : vector<1x22x16xf32> to vector<22x16xf32>
    %c49 = arith.constant 49 : index
    %296 = memref.load %arg1[%c49] : memref<98xf32, #tpu.memory_space<smem>>
    %297 = vector.extract_strided_slice %295 {offsets = [0, 0], sizes = [16, 16], strides = [1, 1]} : vector<22x16xf32> to vector<16x16xf32>
    %298 = vector.broadcast %296 : f32 to vector<16x16xf32>
    %299 = arith.mulf %297, %298 : vector<16x16xf32>
    %300 = arith.addf %293, %299 : vector<16x16xf32>
    %c56 = arith.constant 56 : index
    %301 = memref.load %arg1[%c56] : memref<98xf32, #tpu.memory_space<smem>>
    %302 = vector.extract_strided_slice %295 {offsets = [1, 0], sizes = [16, 16], strides = [1, 1]} : vector<22x16xf32> to vector<16x16xf32>
    %303 = vector.broadcast %301 : f32 to vector<16x16xf32>
    %304 = arith.mulf %302, %303 : vector<16x16xf32>
    %305 = arith.addf %300, %304 : vector<16x16xf32>
    %c63 = arith.constant 63 : index
    %306 = memref.load %arg1[%c63] : memref<98xf32, #tpu.memory_space<smem>>
    %307 = vector.extract_strided_slice %295 {offsets = [2, 0], sizes = [16, 16], strides = [1, 1]} : vector<22x16xf32> to vector<16x16xf32>
    %308 = vector.broadcast %306 : f32 to vector<16x16xf32>
    %309 = arith.mulf %307, %308 : vector<16x16xf32>
    %310 = arith.addf %305, %309 : vector<16x16xf32>
    %c70 = arith.constant 70 : index
    %311 = memref.load %arg1[%c70] : memref<98xf32, #tpu.memory_space<smem>>
    %312 = vector.extract_strided_slice %295 {offsets = [3, 0], sizes = [16, 16], strides = [1, 1]} : vector<22x16xf32> to vector<16x16xf32>
    %313 = vector.broadcast %311 : f32 to vector<16x16xf32>
    %314 = arith.mulf %312, %313 : vector<16x16xf32>
    %315 = arith.addf %310, %314 : vector<16x16xf32>
    %c77 = arith.constant 77 : index
    %316 = memref.load %arg1[%c77] : memref<98xf32, #tpu.memory_space<smem>>
    %317 = vector.extract_strided_slice %295 {offsets = [4, 0], sizes = [16, 16], strides = [1, 1]} : vector<22x16xf32> to vector<16x16xf32>
    %318 = vector.broadcast %316 : f32 to vector<16x16xf32>
    %319 = arith.mulf %317, %318 : vector<16x16xf32>
    %320 = arith.addf %315, %319 : vector<16x16xf32>
    %c84 = arith.constant 84 : index
    %321 = memref.load %arg1[%c84] : memref<98xf32, #tpu.memory_space<smem>>
    %322 = vector.extract_strided_slice %295 {offsets = [5, 0], sizes = [16, 16], strides = [1, 1]} : vector<22x16xf32> to vector<16x16xf32>
    %323 = vector.broadcast %321 : f32 to vector<16x16xf32>
    %324 = arith.mulf %322, %323 : vector<16x16xf32>
    %325 = arith.addf %320, %324 : vector<16x16xf32>
    %c91 = arith.constant 91 : index
    %326 = memref.load %arg1[%c91] : memref<98xf32, #tpu.memory_space<smem>>
    %327 = vector.extract_strided_slice %295 {offsets = [6, 0], sizes = [16, 16], strides = [1, 1]} : vector<22x16xf32> to vector<16x16xf32>
    %328 = vector.broadcast %326 : f32 to vector<16x16xf32>
    %329 = arith.mulf %327, %328 : vector<16x16xf32>
    %330 = arith.addf %325, %329 : vector<16x16xf32>
    %c1_39 = arith.constant 1 : index
    %c0_40 = arith.constant 0 : index
    %c1_41 = arith.constant 1 : index
    %331 = vector.load %arg4[%c1_39, %c0_40, %c1_41] : memref<2x22x22xf32, #tpu.memory_space<vmem>>, vector<1x22x16xf32>
    %332 = vector.shape_cast %331 : vector<1x22x16xf32> to vector<22x16xf32>
    %c50 = arith.constant 50 : index
    %333 = memref.load %arg1[%c50] : memref<98xf32, #tpu.memory_space<smem>>
    %334 = vector.extract_strided_slice %332 {offsets = [0, 0], sizes = [16, 16], strides = [1, 1]} : vector<22x16xf32> to vector<16x16xf32>
    %335 = vector.broadcast %333 : f32 to vector<16x16xf32>
    %336 = arith.mulf %334, %335 : vector<16x16xf32>
    %337 = arith.addf %330, %336 : vector<16x16xf32>
    %c57 = arith.constant 57 : index
    %338 = memref.load %arg1[%c57] : memref<98xf32, #tpu.memory_space<smem>>
    %339 = vector.extract_strided_slice %332 {offsets = [1, 0], sizes = [16, 16], strides = [1, 1]} : vector<22x16xf32> to vector<16x16xf32>
    %340 = vector.broadcast %338 : f32 to vector<16x16xf32>
    %341 = arith.mulf %339, %340 : vector<16x16xf32>
    %342 = arith.addf %337, %341 : vector<16x16xf32>
    %c64 = arith.constant 64 : index
    %343 = memref.load %arg1[%c64] : memref<98xf32, #tpu.memory_space<smem>>
    %344 = vector.extract_strided_slice %332 {offsets = [2, 0], sizes = [16, 16], strides = [1, 1]} : vector<22x16xf32> to vector<16x16xf32>
    %345 = vector.broadcast %343 : f32 to vector<16x16xf32>
    %346 = arith.mulf %344, %345 : vector<16x16xf32>
    %347 = arith.addf %342, %346 : vector<16x16xf32>
    %c71 = arith.constant 71 : index
    %348 = memref.load %arg1[%c71] : memref<98xf32, #tpu.memory_space<smem>>
    %349 = vector.extract_strided_slice %332 {offsets = [3, 0], sizes = [16, 16], strides = [1, 1]} : vector<22x16xf32> to vector<16x16xf32>
    %350 = vector.broadcast %348 : f32 to vector<16x16xf32>
    %351 = arith.mulf %349, %350 : vector<16x16xf32>
    %352 = arith.addf %347, %351 : vector<16x16xf32>
    %c78 = arith.constant 78 : index
    %353 = memref.load %arg1[%c78] : memref<98xf32, #tpu.memory_space<smem>>
    %354 = vector.extract_strided_slice %332 {offsets = [4, 0], sizes = [16, 16], strides = [1, 1]} : vector<22x16xf32> to vector<16x16xf32>
    %355 = vector.broadcast %353 : f32 to vector<16x16xf32>
    %356 = arith.mulf %354, %355 : vector<16x16xf32>
    %357 = arith.addf %352, %356 : vector<16x16xf32>
    %c85 = arith.constant 85 : index
    %358 = memref.load %arg1[%c85] : memref<98xf32, #tpu.memory_space<smem>>
    %359 = vector.extract_strided_slice %332 {offsets = [5, 0], sizes = [16, 16], strides = [1, 1]} : vector<22x16xf32> to vector<16x16xf32>
    %360 = vector.broadcast %358 : f32 to vector<16x16xf32>
    %361 = arith.mulf %359, %360 : vector<16x16xf32>
    %362 = arith.addf %357, %361 : vector<16x16xf32>
    %c92 = arith.constant 92 : index
    %363 = memref.load %arg1[%c92] : memref<98xf32, #tpu.memory_space<smem>>
    %364 = vector.extract_strided_slice %332 {offsets = [6, 0], sizes = [16, 16], strides = [1, 1]} : vector<22x16xf32> to vector<16x16xf32>
    %365 = vector.broadcast %363 : f32 to vector<16x16xf32>
    %366 = arith.mulf %364, %365 : vector<16x16xf32>
    %367 = arith.addf %362, %366 : vector<16x16xf32>
    %c1_42 = arith.constant 1 : index
    %c0_43 = arith.constant 0 : index
    %c2_44 = arith.constant 2 : index
    %368 = vector.load %arg4[%c1_42, %c0_43, %c2_44] : memref<2x22x22xf32, #tpu.memory_space<vmem>>, vector<1x22x16xf32>
    %369 = vector.shape_cast %368 : vector<1x22x16xf32> to vector<22x16xf32>
    %c51 = arith.constant 51 : index
    %370 = memref.load %arg1[%c51] : memref<98xf32, #tpu.memory_space<smem>>
    %371 = vector.extract_strided_slice %369 {offsets = [0, 0], sizes = [16, 16], strides = [1, 1]} : vector<22x16xf32> to vector<16x16xf32>
    %372 = vector.broadcast %370 : f32 to vector<16x16xf32>
    %373 = arith.mulf %371, %372 : vector<16x16xf32>
    %374 = arith.addf %367, %373 : vector<16x16xf32>
    %c58 = arith.constant 58 : index
    %375 = memref.load %arg1[%c58] : memref<98xf32, #tpu.memory_space<smem>>
    %376 = vector.extract_strided_slice %369 {offsets = [1, 0], sizes = [16, 16], strides = [1, 1]} : vector<22x16xf32> to vector<16x16xf32>
    %377 = vector.broadcast %375 : f32 to vector<16x16xf32>
    %378 = arith.mulf %376, %377 : vector<16x16xf32>
    %379 = arith.addf %374, %378 : vector<16x16xf32>
    %c65 = arith.constant 65 : index
    %380 = memref.load %arg1[%c65] : memref<98xf32, #tpu.memory_space<smem>>
    %381 = vector.extract_strided_slice %369 {offsets = [2, 0], sizes = [16, 16], strides = [1, 1]} : vector<22x16xf32> to vector<16x16xf32>
    %382 = vector.broadcast %380 : f32 to vector<16x16xf32>
    %383 = arith.mulf %381, %382 : vector<16x16xf32>
    %384 = arith.addf %379, %383 : vector<16x16xf32>
    %c72 = arith.constant 72 : index
    %385 = memref.load %arg1[%c72] : memref<98xf32, #tpu.memory_space<smem>>
    %386 = vector.extract_strided_slice %369 {offsets = [3, 0], sizes = [16, 16], strides = [1, 1]} : vector<22x16xf32> to vector<16x16xf32>
    %387 = vector.broadcast %385 : f32 to vector<16x16xf32>
    %388 = arith.mulf %386, %387 : vector<16x16xf32>
    %389 = arith.addf %384, %388 : vector<16x16xf32>
    %c79 = arith.constant 79 : index
    %390 = memref.load %arg1[%c79] : memref<98xf32, #tpu.memory_space<smem>>
    %391 = vector.extract_strided_slice %369 {offsets = [4, 0], sizes = [16, 16], strides = [1, 1]} : vector<22x16xf32> to vector<16x16xf32>
    %392 = vector.broadcast %390 : f32 to vector<16x16xf32>
    %393 = arith.mulf %391, %392 : vector<16x16xf32>
    %394 = arith.addf %389, %393 : vector<16x16xf32>
    %c86 = arith.constant 86 : index
    %395 = memref.load %arg1[%c86] : memref<98xf32, #tpu.memory_space<smem>>
    %396 = vector.extract_strided_slice %369 {offsets = [5, 0], sizes = [16, 16], strides = [1, 1]} : vector<22x16xf32> to vector<16x16xf32>
    %397 = vector.broadcast %395 : f32 to vector<16x16xf32>
    %398 = arith.mulf %396, %397 : vector<16x16xf32>
    %399 = arith.addf %394, %398 : vector<16x16xf32>
    %c93 = arith.constant 93 : index
    %400 = memref.load %arg1[%c93] : memref<98xf32, #tpu.memory_space<smem>>
    %401 = vector.extract_strided_slice %369 {offsets = [6, 0], sizes = [16, 16], strides = [1, 1]} : vector<22x16xf32> to vector<16x16xf32>
    %402 = vector.broadcast %400 : f32 to vector<16x16xf32>
    %403 = arith.mulf %401, %402 : vector<16x16xf32>
    %404 = arith.addf %399, %403 : vector<16x16xf32>
    %c1_45 = arith.constant 1 : index
    %c0_46 = arith.constant 0 : index
    %c3_47 = arith.constant 3 : index
    %405 = vector.load %arg4[%c1_45, %c0_46, %c3_47] : memref<2x22x22xf32, #tpu.memory_space<vmem>>, vector<1x22x16xf32>
    %406 = vector.shape_cast %405 : vector<1x22x16xf32> to vector<22x16xf32>
    %c52 = arith.constant 52 : index
    %407 = memref.load %arg1[%c52] : memref<98xf32, #tpu.memory_space<smem>>
    %408 = vector.extract_strided_slice %406 {offsets = [0, 0], sizes = [16, 16], strides = [1, 1]} : vector<22x16xf32> to vector<16x16xf32>
    %409 = vector.broadcast %407 : f32 to vector<16x16xf32>
    %410 = arith.mulf %408, %409 : vector<16x16xf32>
    %411 = arith.addf %404, %410 : vector<16x16xf32>
    %c59 = arith.constant 59 : index
    %412 = memref.load %arg1[%c59] : memref<98xf32, #tpu.memory_space<smem>>
    %413 = vector.extract_strided_slice %406 {offsets = [1, 0], sizes = [16, 16], strides = [1, 1]} : vector<22x16xf32> to vector<16x16xf32>
    %414 = vector.broadcast %412 : f32 to vector<16x16xf32>
    %415 = arith.mulf %413, %414 : vector<16x16xf32>
    %416 = arith.addf %411, %415 : vector<16x16xf32>
    %c66 = arith.constant 66 : index
    %417 = memref.load %arg1[%c66] : memref<98xf32, #tpu.memory_space<smem>>
    %418 = vector.extract_strided_slice %406 {offsets = [2, 0], sizes = [16, 16], strides = [1, 1]} : vector<22x16xf32> to vector<16x16xf32>
    %419 = vector.broadcast %417 : f32 to vector<16x16xf32>
    %420 = arith.mulf %418, %419 : vector<16x16xf32>
    %421 = arith.addf %416, %420 : vector<16x16xf32>
    %c73 = arith.constant 73 : index
    %422 = memref.load %arg1[%c73] : memref<98xf32, #tpu.memory_space<smem>>
    %423 = vector.extract_strided_slice %406 {offsets = [3, 0], sizes = [16, 16], strides = [1, 1]} : vector<22x16xf32> to vector<16x16xf32>
    %424 = vector.broadcast %422 : f32 to vector<16x16xf32>
    %425 = arith.mulf %423, %424 : vector<16x16xf32>
    %426 = arith.addf %421, %425 : vector<16x16xf32>
    %c80 = arith.constant 80 : index
    %427 = memref.load %arg1[%c80] : memref<98xf32, #tpu.memory_space<smem>>
    %428 = vector.extract_strided_slice %406 {offsets = [4, 0], sizes = [16, 16], strides = [1, 1]} : vector<22x16xf32> to vector<16x16xf32>
    %429 = vector.broadcast %427 : f32 to vector<16x16xf32>
    %430 = arith.mulf %428, %429 : vector<16x16xf32>
    %431 = arith.addf %426, %430 : vector<16x16xf32>
    %c87 = arith.constant 87 : index
    %432 = memref.load %arg1[%c87] : memref<98xf32, #tpu.memory_space<smem>>
    %433 = vector.extract_strided_slice %406 {offsets = [5, 0], sizes = [16, 16], strides = [1, 1]} : vector<22x16xf32> to vector<16x16xf32>
    %434 = vector.broadcast %432 : f32 to vector<16x16xf32>
    %435 = arith.mulf %433, %434 : vector<16x16xf32>
    %436 = arith.addf %431, %435 : vector<16x16xf32>
    %c94 = arith.constant 94 : index
    %437 = memref.load %arg1[%c94] : memref<98xf32, #tpu.memory_space<smem>>
    %438 = vector.extract_strided_slice %406 {offsets = [6, 0], sizes = [16, 16], strides = [1, 1]} : vector<22x16xf32> to vector<16x16xf32>
    %439 = vector.broadcast %437 : f32 to vector<16x16xf32>
    %440 = arith.mulf %438, %439 : vector<16x16xf32>
    %441 = arith.addf %436, %440 : vector<16x16xf32>
    %c1_48 = arith.constant 1 : index
    %c0_49 = arith.constant 0 : index
    %c4_50 = arith.constant 4 : index
    %442 = vector.load %arg4[%c1_48, %c0_49, %c4_50] : memref<2x22x22xf32, #tpu.memory_space<vmem>>, vector<1x22x16xf32>
    %443 = vector.shape_cast %442 : vector<1x22x16xf32> to vector<22x16xf32>
    %c53 = arith.constant 53 : index
    %444 = memref.load %arg1[%c53] : memref<98xf32, #tpu.memory_space<smem>>
    %445 = vector.extract_strided_slice %443 {offsets = [0, 0], sizes = [16, 16], strides = [1, 1]} : vector<22x16xf32> to vector<16x16xf32>
    %446 = vector.broadcast %444 : f32 to vector<16x16xf32>
    %447 = arith.mulf %445, %446 : vector<16x16xf32>
    %448 = arith.addf %441, %447 : vector<16x16xf32>
    %c60 = arith.constant 60 : index
    %449 = memref.load %arg1[%c60] : memref<98xf32, #tpu.memory_space<smem>>
    %450 = vector.extract_strided_slice %443 {offsets = [1, 0], sizes = [16, 16], strides = [1, 1]} : vector<22x16xf32> to vector<16x16xf32>
    %451 = vector.broadcast %449 : f32 to vector<16x16xf32>
    %452 = arith.mulf %450, %451 : vector<16x16xf32>
    %453 = arith.addf %448, %452 : vector<16x16xf32>
    %c67 = arith.constant 67 : index
    %454 = memref.load %arg1[%c67] : memref<98xf32, #tpu.memory_space<smem>>
    %455 = vector.extract_strided_slice %443 {offsets = [2, 0], sizes = [16, 16], strides = [1, 1]} : vector<22x16xf32> to vector<16x16xf32>
    %456 = vector.broadcast %454 : f32 to vector<16x16xf32>
    %457 = arith.mulf %455, %456 : vector<16x16xf32>
    %458 = arith.addf %453, %457 : vector<16x16xf32>
    %c74 = arith.constant 74 : index
    %459 = memref.load %arg1[%c74] : memref<98xf32, #tpu.memory_space<smem>>
    %460 = vector.extract_strided_slice %443 {offsets = [3, 0], sizes = [16, 16], strides = [1, 1]} : vector<22x16xf32> to vector<16x16xf32>
    %461 = vector.broadcast %459 : f32 to vector<16x16xf32>
    %462 = arith.mulf %460, %461 : vector<16x16xf32>
    %463 = arith.addf %458, %462 : vector<16x16xf32>
    %c81 = arith.constant 81 : index
    %464 = memref.load %arg1[%c81] : memref<98xf32, #tpu.memory_space<smem>>
    %465 = vector.extract_strided_slice %443 {offsets = [4, 0], sizes = [16, 16], strides = [1, 1]} : vector<22x16xf32> to vector<16x16xf32>
    %466 = vector.broadcast %464 : f32 to vector<16x16xf32>
    %467 = arith.mulf %465, %466 : vector<16x16xf32>
    %468 = arith.addf %463, %467 : vector<16x16xf32>
    %c88 = arith.constant 88 : index
    %469 = memref.load %arg1[%c88] : memref<98xf32, #tpu.memory_space<smem>>
    %470 = vector.extract_strided_slice %443 {offsets = [5, 0], sizes = [16, 16], strides = [1, 1]} : vector<22x16xf32> to vector<16x16xf32>
    %471 = vector.broadcast %469 : f32 to vector<16x16xf32>
    %472 = arith.mulf %470, %471 : vector<16x16xf32>
    %473 = arith.addf %468, %472 : vector<16x16xf32>
    %c95 = arith.constant 95 : index
    %474 = memref.load %arg1[%c95] : memref<98xf32, #tpu.memory_space<smem>>
    %475 = vector.extract_strided_slice %443 {offsets = [6, 0], sizes = [16, 16], strides = [1, 1]} : vector<22x16xf32> to vector<16x16xf32>
    %476 = vector.broadcast %474 : f32 to vector<16x16xf32>
    %477 = arith.mulf %475, %476 : vector<16x16xf32>
    %478 = arith.addf %473, %477 : vector<16x16xf32>
    %c1_51 = arith.constant 1 : index
    %c0_52 = arith.constant 0 : index
    %c5_53 = arith.constant 5 : index
    %479 = vector.load %arg4[%c1_51, %c0_52, %c5_53] : memref<2x22x22xf32, #tpu.memory_space<vmem>>, vector<1x22x16xf32>
    %480 = vector.shape_cast %479 : vector<1x22x16xf32> to vector<22x16xf32>
    %c54 = arith.constant 54 : index
    %481 = memref.load %arg1[%c54] : memref<98xf32, #tpu.memory_space<smem>>
    %482 = vector.extract_strided_slice %480 {offsets = [0, 0], sizes = [16, 16], strides = [1, 1]} : vector<22x16xf32> to vector<16x16xf32>
    %483 = vector.broadcast %481 : f32 to vector<16x16xf32>
    %484 = arith.mulf %482, %483 : vector<16x16xf32>
    %485 = arith.addf %478, %484 : vector<16x16xf32>
    %c61 = arith.constant 61 : index
    %486 = memref.load %arg1[%c61] : memref<98xf32, #tpu.memory_space<smem>>
    %487 = vector.extract_strided_slice %480 {offsets = [1, 0], sizes = [16, 16], strides = [1, 1]} : vector<22x16xf32> to vector<16x16xf32>
    %488 = vector.broadcast %486 : f32 to vector<16x16xf32>
    %489 = arith.mulf %487, %488 : vector<16x16xf32>
    %490 = arith.addf %485, %489 : vector<16x16xf32>
    %c68 = arith.constant 68 : index
    %491 = memref.load %arg1[%c68] : memref<98xf32, #tpu.memory_space<smem>>
    %492 = vector.extract_strided_slice %480 {offsets = [2, 0], sizes = [16, 16], strides = [1, 1]} : vector<22x16xf32> to vector<16x16xf32>
    %493 = vector.broadcast %491 : f32 to vector<16x16xf32>
    %494 = arith.mulf %492, %493 : vector<16x16xf32>
    %495 = arith.addf %490, %494 : vector<16x16xf32>
    %c75 = arith.constant 75 : index
    %496 = memref.load %arg1[%c75] : memref<98xf32, #tpu.memory_space<smem>>
    %497 = vector.extract_strided_slice %480 {offsets = [3, 0], sizes = [16, 16], strides = [1, 1]} : vector<22x16xf32> to vector<16x16xf32>
    %498 = vector.broadcast %496 : f32 to vector<16x16xf32>
    %499 = arith.mulf %497, %498 : vector<16x16xf32>
    %500 = arith.addf %495, %499 : vector<16x16xf32>
    %c82 = arith.constant 82 : index
    %501 = memref.load %arg1[%c82] : memref<98xf32, #tpu.memory_space<smem>>
    %502 = vector.extract_strided_slice %480 {offsets = [4, 0], sizes = [16, 16], strides = [1, 1]} : vector<22x16xf32> to vector<16x16xf32>
    %503 = vector.broadcast %501 : f32 to vector<16x16xf32>
    %504 = arith.mulf %502, %503 : vector<16x16xf32>
    %505 = arith.addf %500, %504 : vector<16x16xf32>
    %c89 = arith.constant 89 : index
    %506 = memref.load %arg1[%c89] : memref<98xf32, #tpu.memory_space<smem>>
    %507 = vector.extract_strided_slice %480 {offsets = [5, 0], sizes = [16, 16], strides = [1, 1]} : vector<22x16xf32> to vector<16x16xf32>
    %508 = vector.broadcast %506 : f32 to vector<16x16xf32>
    %509 = arith.mulf %507, %508 : vector<16x16xf32>
    %510 = arith.addf %505, %509 : vector<16x16xf32>
    %c96 = arith.constant 96 : index
    %511 = memref.load %arg1[%c96] : memref<98xf32, #tpu.memory_space<smem>>
    %512 = vector.extract_strided_slice %480 {offsets = [6, 0], sizes = [16, 16], strides = [1, 1]} : vector<22x16xf32> to vector<16x16xf32>
    %513 = vector.broadcast %511 : f32 to vector<16x16xf32>
    %514 = arith.mulf %512, %513 : vector<16x16xf32>
    %515 = arith.addf %510, %514 : vector<16x16xf32>
    %c1_54 = arith.constant 1 : index
    %c0_55 = arith.constant 0 : index
    %c6_56 = arith.constant 6 : index
    %516 = vector.load %arg4[%c1_54, %c0_55, %c6_56] : memref<2x22x22xf32, #tpu.memory_space<vmem>>, vector<1x22x16xf32>
    %517 = vector.shape_cast %516 : vector<1x22x16xf32> to vector<22x16xf32>
    %c55 = arith.constant 55 : index
    %518 = memref.load %arg1[%c55] : memref<98xf32, #tpu.memory_space<smem>>
    %519 = vector.extract_strided_slice %517 {offsets = [0, 0], sizes = [16, 16], strides = [1, 1]} : vector<22x16xf32> to vector<16x16xf32>
    %520 = vector.broadcast %518 : f32 to vector<16x16xf32>
    %521 = arith.mulf %519, %520 : vector<16x16xf32>
    %522 = arith.addf %515, %521 : vector<16x16xf32>
    %c62 = arith.constant 62 : index
    %523 = memref.load %arg1[%c62] : memref<98xf32, #tpu.memory_space<smem>>
    %524 = vector.extract_strided_slice %517 {offsets = [1, 0], sizes = [16, 16], strides = [1, 1]} : vector<22x16xf32> to vector<16x16xf32>
    %525 = vector.broadcast %523 : f32 to vector<16x16xf32>
    %526 = arith.mulf %524, %525 : vector<16x16xf32>
    %527 = arith.addf %522, %526 : vector<16x16xf32>
    %c69 = arith.constant 69 : index
    %528 = memref.load %arg1[%c69] : memref<98xf32, #tpu.memory_space<smem>>
    %529 = vector.extract_strided_slice %517 {offsets = [2, 0], sizes = [16, 16], strides = [1, 1]} : vector<22x16xf32> to vector<16x16xf32>
    %530 = vector.broadcast %528 : f32 to vector<16x16xf32>
    %531 = arith.mulf %529, %530 : vector<16x16xf32>
    %532 = arith.addf %527, %531 : vector<16x16xf32>
    %c76 = arith.constant 76 : index
    %533 = memref.load %arg1[%c76] : memref<98xf32, #tpu.memory_space<smem>>
    %534 = vector.extract_strided_slice %517 {offsets = [3, 0], sizes = [16, 16], strides = [1, 1]} : vector<22x16xf32> to vector<16x16xf32>
    %535 = vector.broadcast %533 : f32 to vector<16x16xf32>
    %536 = arith.mulf %534, %535 : vector<16x16xf32>
    %537 = arith.addf %532, %536 : vector<16x16xf32>
    %c83 = arith.constant 83 : index
    %538 = memref.load %arg1[%c83] : memref<98xf32, #tpu.memory_space<smem>>
    %539 = vector.extract_strided_slice %517 {offsets = [4, 0], sizes = [16, 16], strides = [1, 1]} : vector<22x16xf32> to vector<16x16xf32>
    %540 = vector.broadcast %538 : f32 to vector<16x16xf32>
    %541 = arith.mulf %539, %540 : vector<16x16xf32>
    %542 = arith.addf %537, %541 : vector<16x16xf32>
    %c90 = arith.constant 90 : index
    %543 = memref.load %arg1[%c90] : memref<98xf32, #tpu.memory_space<smem>>
    %544 = vector.extract_strided_slice %517 {offsets = [5, 0], sizes = [16, 16], strides = [1, 1]} : vector<22x16xf32> to vector<16x16xf32>
    %545 = vector.broadcast %543 : f32 to vector<16x16xf32>
    %546 = arith.mulf %544, %545 : vector<16x16xf32>
    %547 = arith.addf %542, %546 : vector<16x16xf32>
    %c97 = arith.constant 97 : index
    %548 = memref.load %arg1[%c97] : memref<98xf32, #tpu.memory_space<smem>>
    %549 = vector.extract_strided_slice %517 {offsets = [6, 0], sizes = [16, 16], strides = [1, 1]} : vector<22x16xf32> to vector<16x16xf32>
    %550 = vector.broadcast %548 : f32 to vector<16x16xf32>
    %551 = arith.mulf %549, %550 : vector<16x16xf32>
    %552 = arith.addf %547, %551 : vector<16x16xf32>
    %cst_57 = arith.constant 0.000000e+00 : f32
    %553 = vector.broadcast %cst_57 : f32 to vector<16x16xf32>
    %554 = arith.subf %553, %552 : vector<16x16xf32>
    %555 = math.exp %554 : vector<16x16xf32>
    %cst_58 = arith.constant 1.000000e+00 : f32
    %556 = vector.broadcast %cst_58 : f32 to vector<16x16xf32>
    %557 = arith.addf %556, %555 : vector<16x16xf32>
    %cst_59 = arith.constant 1.000000e+00 : f32
    %558 = vector.broadcast %cst_59 : f32 to vector<16x16xf32>
    %559 = arith.divf %558, %557 : vector<16x16xf32>
    %c0_60 = arith.constant 0 : index
    %c0_61 = arith.constant 0 : index
    %c0_62 = arith.constant 0 : index
    %c0_63 = arith.constant 0 : index
    %560 = vector.load %arg3[%c0_60, %c0_61, %c0_62, %c0_63] : memref<1x1x16x16xf32, #tpu.memory_space<vmem>>, vector<1x1x16x16xf32>
    %561 = vector.shape_cast %560 : vector<1x1x16x16xf32> to vector<16x16xf32>
    %562 = vector.shape_cast %559 : vector<16x16xf32> to vector<1x1x16x16xf32>
    tpu.vector_store %arg3[%c0_60, %c0_61, %c0_62, %c0_63], %562 {strides = array<i32>} : memref<1x1x16x16xf32, #tpu.memory_space<vmem>>, vector<1x1x16x16xf32>,
    return
  }
  func.func @transform_0(%arg0: i32) -> i32 {
    %c0_i32 = arith.constant 0 : i32
    %c0_i32_0 = arith.constant 0 : i32
    return %c0_i32 : i32
  }
  func.func @transform_1(%arg0: i32) -> (i32, i32, i32, i32) {
    %c0_i32 = arith.constant 0 : i32
    %c0_i32_0 = arith.constant 0 : i32
    %c0_i32_1 = arith.constant 0 : i32
    %c0_i32_2 = arith.constant 0 : i32
    return %arg0, %c0_i32, %c0_i32_0, %c0_i32_1 : i32, i32, i32, i32
  }
  func.func @transform_2(%arg0: i32) -> (i32, i32, i32, i32) {
    %c0_i32 = arith.constant 0 : i32
    %c0_i32_0 = arith.constant 0 : i32
    %c0_i32_1 = arith.constant 0 : i32
    %c0_i32_2 = arith.constant 0 : i32
    return %arg0, %c0_i32, %c0_i32_0, %c0_i32_1 : i32, i32, i32, i32
  }
}

</mosaic_0001>

<llo_original>
// kernel: spatial_attention.1
$region0: #{spatial_attention.1}
  #allocation0 [shape = 'u32[]', space=smem, size = 0x4, offset = 0x4, fixed_abs, tag = 'smem constant byte address 0x4 - core index']
  #allocation1 [shape = 'u32[144,128]{1,0:T(1,128)}', space=vmem, size = 0x12000, scoped, tag = 'internal scratch']
  #allocation2 [shape = 'f32[2,22,22]{2,1,0:T(8,128)}', space=vmem, size = 0x6000, scoped, tag = 'scratch operand']
  %s0 = inlined_call_operand.vmem [shape: f32[98], index: 0, kind: input, shape index: {}]
  %s1 = inlined_call_operand.hbm [shape: f32[2,4,16,16], index: 1, kind: input, shape index: {}]
  %s2 = inlined_call_operand.hbm [shape: f32[2,1,16,16], index: 2, kind: output, shape index: {}]
  %s3 = sld [smem:[#allocation0]]
  $region49: #{spatial_attention.1} parent=0
    _
  %s5 = ssub.s32 1, %s3
  %s6 = scalar_select 0, %s5, %s3
  $region1: #{spatial_attention.1} parent=0
    #allocation3 [shape = 'u8[512]{0}', space=smem, size = 0x200, scoped, tag = 'input window, operand 0, single buffered']
    #allocation4 [shape = 's32[2]{0}', space=sflag, size = 0x8, scoped, tag = 'scoped memory for spatial_attention.1']
    #allocation5 [shape = 's32[2]{0}', space=sflag, size = 0x8, scoped, tag = 'scoped memory for spatial_attention.1']
    #allocation6 [shape = 's32[2]{0}', space=sflag, size = 0x8, scoped, tag = 'scoped memory for spatial_attention.1']
    #allocation7 [shape = 'u8[65536]{0}', space=vmem, size = 0x10000, scoped, tag = 'input window, operand 1']
    #allocation8 [shape = 'u8[16384]{0}', space=vmem, size = 0x4000, scoped, tag = 'output window, operand 0']
    %7 = vsyncpa [#allocation6], 0
    %8 = vsyncpa [#allocation4], 0
    %s9 = scalar_lea.sflag [#allocation4], 1
    %10 = vsyncpa %s9, 0
    %11 = vsyncpa [#allocation5], 0
    %s12 = scalar_lea.sflag [#allocation5], 1
    %13 = vsyncpa %s12, 0
    loop: start=0, step=1, limit=4
    $region2: #{spatial_attention.1} parent=1 // loop_pre_header
      _
    $region3: #{spatial_attention.1} parent=1 // loop_header
      %s15 = sphi 0, %s19
      %p16 = scmp.ge.s32.totalorder %s15, 4
      %s23 = sphi 0, %s23
      %s25 = sphi 0, %s23
      %s26 = sphi 0, %s25
      %s40 = sphi 0, %s26
      %s46 = sphi 0, %s48
      %s49 = sphi 0, %s46
      %s50 = sphi 0, %s49
      %s66 = sphi 0, %s50
      %s72 = sphi 0, %s74
      %s75 = sphi 0, %s72
      %s76 = sphi 0, %s75
      %s92 = sphi 0, %s76
    $region4: #{spatial_attention.1} parent=1 // loop_header_branch
      %18 = sbr.rel (%p16) target = $region8
    $region5: #{spatial_attention.1} parent=1 // loop_body
      %s20 = ssub.s32 %s15, 1
      %s21 = ssub.s32 %s15, 2
      %s22 = sadd.s32 %s15, 1
      %s24 = sadd.s32 %s23, 1
      %p27 = scmp.eq.s32.totalorder %s15, 1
      %p28 = scmp.ne.s32.totalorder %s23, %s25
      %p29 = scmp.eq.s32.totalorder %s15, 0
      %p30 = por %p28, %p29
      %p31 = scmp.ne.s32.totalorder %s23, %s25
      %p32 = scmp.eq.s32.totalorder %s20, 1
      %p33 = por %p31, %p32
      %p34 = scmp.ne.s32.totalorder %s25, %s26
      %p35 = scmp.eq.s32.totalorder %s20, 0
      %p36 = por %p34, %p35
      %p37 = scmp.ne.s32.totalorder %s25, %s26
      %p38 = scmp.eq.s32.totalorder %s21, 1
      %p39 = por %p37, %p38
      %p41 = scmp.ne.s32.totalorder %s26, %s40
      %p42 = scmp.eq.s32.totalorder %s21, 0
      %p43 = por %p41, %p42
      %s44 = ssub.s32 %s15, %s22
      %p45 = scmp.eq.s32.totalorder %s44, 0
      %s47 = sadd.s32 %s46, 1
      %s48 = scalar_select %p45, %s46, %s47
      %p51 = pneg %p45
      %p52 = scmp.eq.s32.totalorder %s15, 1
      %p53 = por %p51, %p52
      %p54 = scmp.ne.s32.totalorder %s46, %s49
      %p55 = scmp.eq.s32.totalorder %s15, 0
      %p56 = por %p54, %p55
      %p57 = scmp.ne.s32.totalorder %s46, %s49
      %p58 = scmp.eq.s32.totalorder %s20, 1
      %p59 = por %p57, %p58
      %p60 = scmp.ne.s32.totalorder %s49, %s50
      %p61 = scmp.eq.s32.totalorder %s20, 0
      %p62 = por %p60, %p61
      %p63 = scmp.ne.s32.totalorder %s49, %s50
      %p64 = scmp.eq.s32.totalorder %s21, 1
      %p65 = por %p63, %p64
      %p67 = scmp.ne.s32.totalorder %s50, %s66
      %p68 = scmp.eq.s32.totalorder %s21, 0
      %p69 = por %p67, %p68
      %s70 = ssub.s32 %s15, %s22
      %p71 = scmp.eq.s32.totalorder %s70, 0
      %s73 = sadd.s32 %s72, 1
      %s74 = scalar_select %p71, %s72, %s73
      %p77 = pneg %p71
      %p78 = scmp.eq.s32.totalorder %s15, 1
      %p79 = por %p77, %p78
      %p80 = scmp.ne.s32.totalorder %s72, %s75
      %p81 = scmp.eq.s32.totalorder %s15, 0
      %p82 = por %p80, %p81
      %p83 = scmp.ne.s32.totalorder %s72, %s75
      %p84 = scmp.eq.s32.totalorder %s20, 1
      %p85 = por %p83, %p84
      %p86 = scmp.ne.s32.totalorder %s75, %s76
      %p87 = scmp.eq.s32.totalorder %s20, 0
      %p88 = por %p86, %p87
      %p89 = scmp.ne.s32.totalorder %s75, %s76
      %p90 = scmp.eq.s32.totalorder %s21, 1
      %p91 = por %p89, %p90
      %p93 = scmp.ne.s32.totalorder %s76, %s92
      %p94 = scmp.eq.s32.totalorder %s21, 0
      %p95 = por %p93, %p94
      %p96 = scmp.le.s32.totalorder 1, %s15
      %p97 = scmp.lt.s32.totalorder %s15, 3
      %p98 = pnand %p96, %p97
      %p99 = pneg %p98
      // Predicated region
      $region9: #{spatial_attention.1} parent=5 // pred_check
        _
      $region10: #{spatial_attention.1} parent=5 // pred_check_branch
        %101 = sbr.rel (%p98) target = $region12
      $region11: #{spatial_attention.1} parent=5 // pred_region
        %s102 = ssub.s32 %s15, 1
        // Predicated region
        $region13: #{spatial_attention.1} parent=11 // pred_check
          %p103 = pneg %p36
        $region14: #{spatial_attention.1} parent=11 // pred_check_branch
          %105 = sbr.rel (%p103) target = $region16
        $region15: #{spatial_attention.1} parent=11 // pred_region
          %s107 = ssub.s32 16, 16
          %108 = vsyncadd [#allocation6], %s107
          %s110 = sshll.u32 %s0, 4
          %s111 = int_to_ptr.vmem [resolvable:$true] %s110
          %113 = dma.vmem_to_smem %s111, 16, [#allocation3], [#allocation6]
        $region16: #{spatial_attention.1} parent=11 // pred_fallthru
          _
      $region12: #{spatial_attention.1} parent=5 // pred_fallthru
        _
      %p114 = scmp.lt.s32.totalorder %s15, 2
      // Predicated region
      $region17: #{spatial_attention.1} parent=5 // pred_check
        %p115 = pneg %p114
      $region18: #{spatial_attention.1} parent=5 // pred_check_branch
        %117 = sbr.rel (%p115) target = $region20
      $region19: #{spatial_attention.1} parent=5 // pred_region
        // Predicated region
        $region21: #{spatial_attention.1} parent=19 // pred_check
          %p118 = pneg %p56
        $region22: #{spatial_attention.1} parent=19 // pred_check_branch
          %120 = sbr.rel (%p118) target = $region24
        $region23: #{spatial_attention.1} parent=19 // pred_region
          %s121 = sand.u32 %s46, 1
          %s122 = scalar_lea.sflag [#allocation4], %s121
          %s123 = sand.u32 %s46, 1
          %s124 = smul.addr %s123, 64
          %s125 = scalar_lea.vmem [#allocation7], %s124
          %s127 = ssub.s32 1024, 1024
          %128 = vsyncadd %s122, %s127
          %s129 = smul.addr %s15, 8
          %s130 = smul.addr %s129, 128
          %s131 = scalar_lea.hbm %s1, %s130
          %s132 = sshll.u32 %s125, 4
          %s133 = int_to_ptr.vmem [resolvable:$true] %s132
          %138 = dma.hbm_to_vmem [thread:$0]  %s131, 1024, %s133, %s122, 128, 128, 8
        $region24: #{spatial_attention.1} parent=19 // pred_fallthru
          _
      $region20: #{spatial_attention.1} parent=5 // pred_fallthru
        _
      %p139 = scmp.le.s32.totalorder 1, %s15
      %p140 = scmp.lt.s32.totalorder %s15, 3
      %p141 = pnand %p139, %p140
      %p142 = pneg %p141
      // Predicated region
      $region25: #{spatial_attention.1} parent=5 // pred_check
        _
      $region26: #{spatial_attention.1} parent=5 // pred_check_branch
        %144 = sbr.rel (%p141) target = $region28
      $region27: #{spatial_attention.1} parent=5 // pred_region
        %s145 = ssub.s32 %s15, 1
        // Predicated region
        $region29: #{spatial_attention.1} parent=27 // pred_check
          %p146 = pneg %p36
        $region30: #{spatial_attention.1} parent=27 // pred_check_branch
          %148 = sbr.rel (%p146) target = $region32
        $region31: #{spatial_attention.1} parent=27 // pred_region
          %149 = dma.done [#allocation6], 16
        $region32: #{spatial_attention.1} parent=27 // pred_fallthru
          _
        %s150 = sand.u32 %s49, 1
        %s151 = scalar_lea.sflag [#allocation4], %s150
        %s152 = sand.u32 %s49, 1
        %s153 = smul.addr %s152, 64
        %s154 = scalar_lea.vmem [#allocation7], %s153
        // Predicated region
        $region33: #{spatial_attention.1} parent=27 // pred_check
          %p155 = pneg %p62
        $region34: #{spatial_attention.1} parent=27 // pred_check_branch
          %157 = sbr.rel (%p155) target = $region36
        $region35: #{spatial_attention.1} parent=27 // pred_region
          %158 = dma.done %s151, 1024
        $region36: #{spatial_attention.1} parent=27 // pred_fallthru
          _
        %159 = sfence
        %p160 = pneg %p36
        %p161 = pneg %p33
        %s162 = sand.u32 %s49, 1
        %s163 = scalar_lea.sflag [#allocation4], %s162
        %s164 = sand.u32 %s49, 1
        %s165 = smul.addr %s164, 64
        %s166 = scalar_lea.vmem [#allocation7], %s165
        %p167 = pneg %p62
        %p168 = pneg %p59
        %p169 = pneg %p88
        %p170 = pneg %p85
        %s171 = sand.u32 %s75, 1
        %s172 = scalar_lea.sflag [#allocation5], %s171
        %s173 = sand.u32 %s75, 1
        %s174 = smul.addr %s173, 16
        %s175 = scalar_lea.vmem [#allocation8], %s174
        %v176 = vld [vmem:[%s154] sm:$0xff]
        %v177 = vld [vmem:[%s154 + $0x8] sm:$0xff]
        %v178 = vld [vmem:[%s154 + $0x10] sm:$0xff]
        %v179 = vld [vmem:[%s154 + $0x18] sm:$0xff]
        %v180 = vld [vmem:[%s154 + $0x20] sm:$0xff]
        %v181 = vld [vmem:[%s154 + $0x28] sm:$0xff]
        %v182 = vld [vmem:[%s154 + $0x30] sm:$0xff]
        %v183 = vld [vmem:[%s154 + $0x38] sm:$0xff]
        %v184 = vadd.f32 %v176, %v178
        %v185 = vadd.f32 %v177, %v179
        %v186 = vmax.f32 %v176, %v178
        %v187 = vmax.f32 %v177, %v179
        %v188 = vadd.f32 %v184, %v180
        %v189 = vadd.f32 %v185, %v181
        %v190 = vmax.f32 %v186, %v180
        %v191 = vmax.f32 %v187, %v181
        %v192 = vadd.f32 %v188, %v182
        %v193 = vadd.f32 %v189, %v183
        %v194 = vmax.f32 %v190, %v182
        %v195 = vmax.f32 %v191, %v183
        %v196 = vmul.f32 %v192, 0.25
        %v197 = vmul.f32 %v193, 0.25
        %vm198 = vcmask 179200
        %199 = vst.msk [vmem:[#allocation2] sm:$0xff] %vm198, 0.0
        %200 = vst.msk [vmem:[#allocation2 + $0x8] sm:$0xff] %vm198, 0.0
        %vm201 = vcmask 177152
        %202 = vst.msk [vmem:[#allocation2 + $0x10] sm:$0x3f] %vm201, 0.0
        %203 = vst.msk [vmem:[#allocation2 + $0x18] sm:$0xff] %vm198, 0.0
        %204 = vst.msk [vmem:[#allocation2 + $0x20] sm:$0xff] %vm198, 0.0
        %205 = vst.msk [vmem:[#allocation2 + $0x28] sm:$0x3f] %vm201, 0.0
        %208 = vrot.lane.b32.xlu0 %v196, 3
        %v209 = vpop.permute.xlu0 %208
        %210 = vrot.lane.b32.xlu0 %v197, 3
        %v211 = vpop.permute.xlu0 %210
        %vm214 = vcmask 154648
        %215 = vst.msk [vmem:[#allocation2 + $0x3] sm:$0xff] %vm214, %v209
        %216 = vst.msk [vmem:[#allocation2 + $0xb] sm:$0xff] %vm214, %v211
        %219 = vrot.lane.b32.xlu0 %v194, 3
        %v220 = vpop.permute.xlu0 %219
        %221 = vrot.lane.b32.xlu0 %v195, 3
        %v222 = vpop.permute.xlu0 %221
        %s225 = scalar_lea.vmem [#allocation2], 24
        %226 = vst.msk [vmem:[%s225 + $0x3] sm:$0xff] %vm214, %v220
        %227 = vst.msk [vmem:[%s225 + $0xb] sm:$0xff] %vm214, %v222
        %v228 = vld [vmem:[#allocation2] sm:$0xff]
        %v229 = vld [vmem:[#allocation2 + $0x8] sm:$0xff]
        %v230 = vld [vmem:[#allocation2 + $0x10] sm:$0x3f]
        %s231 = sld [smem:[#allocation3]]
        %v232 = vstv %s231
        %v233 = vmul.f32 %v228, %v232
        %v234 = vmul.f32 %v229, %v232
        %v235 = vadd.f32 %v233, 0.0
        %v236 = vadd.f32 %v234, 0.0
        %s237 = sld [smem:[#allocation3 + $0x7]]
        %v238 = vstv %s237
        %v239 = vmul.f32 %v228, %v238
        %v240 = vmul.f32 %v229, %v238
        %v241 = vmul.f32 %v230, %v238
        %vm245 = vcmask 1046528
        %v246 = vrot.slane %v239, 1
        %v247 = vrot.slane %v240, 1
        %v248 = vsel %vm245, %v246, %v247
        %v249 = vrot.slane %v241, 1
        %v250 = vsel %vm245, %v247, %v249
        %v253 = vadd.f32 %v235, %v248
        %v254 = vadd.f32 %v236, %v250
        %s255 = sld [smem:[#allocation3 + $0xe]]
        %v256 = vstv %s255
        %v257 = vmul.f32 %v228, %v256
        %v258 = vmul.f32 %v229, %v256
        %v259 = vmul.f32 %v230, %v256
        %vm263 = vcmask 1045504
        %v264 = vrot.slane %v257, 2
        %v265 = vrot.slane %v258, 2
        %v266 = vsel %vm263, %v264, %v265
        %v267 = vrot.slane %v259, 2
        %v268 = vsel %vm263, %v265, %v267
        %v271 = vadd.f32 %v253, %v266
        %v272 = vadd.f32 %v254, %v268
        %s273 = sld [smem:[#allocation3 + $0x15]]
        %v274 = vstv %s273
        %v275 = vmul.f32 %v228, %v274
        %v276 = vmul.f32 %v229, %v274
        %v277 = vmul.f32 %v230, %v274
        %vm281 = vcmask 1044480
        %v282 = vrot.slane %v275, 3
        %v283 = vrot.slane %v276, 3
        %v284 = vsel %vm281, %v282, %v283
        %v285 = vrot.slane %v277, 3
        %v286 = vsel %vm281, %v283, %v285
        %v289 = vadd.f32 %v271, %v284
        %v290 = vadd.f32 %v272, %v286
        %s291 = sld [smem:[#allocation3 + $0x1c]]
        %v292 = vstv %s291
        %v293 = vmul.f32 %v228, %v292
        %v294 = vmul.f32 %v229, %v292
        %v295 = vmul.f32 %v230, %v292
        %vm299 = vcmask 1043456
        %v300 = vrot.slane %v293, 4
        %v301 = vrot.slane %v294, 4
        %v302 = vsel %vm299, %v300, %v301
        %v303 = vrot.slane %v295, 4
        %v304 = vsel %vm299, %v301, %v303
        %v307 = vadd.f32 %v289, %v302
        %v308 = vadd.f32 %v290, %v304
        %s309 = sld [smem:[#allocation3 + $0x23]]
        %v310 = vstv %s309
        %v311 = vmul.f32 %v228, %v310
        %v312 = vmul.f32 %v229, %v310
        %v313 = vmul.f32 %v230, %v310
        %vm317 = vcmask 1042432
        %v318 = vrot.slane %v311, 5
        %v319 = vrot.slane %v312, 5
        %v320 = vsel %vm317, %v318, %v319
        %v321 = vrot.slane %v313, 5
        %v322 = vsel %vm317, %v319, %v321
        %v325 = vadd.f32 %v307, %v320
        %v326 = vadd.f32 %v308, %v322
        %s327 = sld [smem:[#allocation3 + $0x2a]]
        %v328 = vstv %s327
        %v329 = vmul.f32 %v228, %v328
        %v330 = vmul.f32 %v229, %v328
        %v331 = vmul.f32 %v230, %v328
        %vm335 = vcmask 1041408
        %v336 = vrot.slane %v329, 6
        %v337 = vrot.slane %v330, 6
        %v338 = vsel %vm335, %v336, %v337
        %v339 = vrot.slane %v331, 6
        %v340 = vsel %vm335, %v337, %v339
        %v343 = vadd.f32 %v325, %v338
        %v344 = vadd.f32 %v326, %v340
        %s345 = sld [smem:[#allocation3 + $0x1]]
        %v346 = vstv %s345
        %v347 = vmul.f32 %v228, %v346
        %v348 = vmul.f32 %v229, %v346
        %351 = vrot.lane.b32.xlu0 %v347, 127
        %v352 = vpop.permute.xlu0 %351
        %353 = vrot.lane.b32.xlu0 %v348, 127
        %v354 = vpop.permute.xlu0 %353
        %v357 = vadd.f32 %v343, %v352
        %v358 = vadd.f32 %v344, %v354
        %s359 = sld [smem:[#allocation3 + $0x8]]
        %v360 = vstv %s359
        %v361 = vmul.f32 %v228, %v360
        %v362 = vmul.f32 %v229, %v360
        %v363 = vmul.f32 %v230, %v360
        %v367 = vrot.slane %v361, 1
        %v368 = vrot.slane %v362, 1
        %v369 = vsel %vm245, %v367, %v368
        %v370 = vrot.slane %v363, 1
        %v371 = vsel %vm245, %v368, %v370
        %372 = vrot.lane.b32.xlu0 %v369, 127
        %v373 = vpop.permute.xlu0 %372
        %374 = vrot.lane.b32.xlu0 %v371, 127
        %v375 = vpop.permute.xlu0 %374
        %v378 = vadd.f32 %v357, %v373
        %v379 = vadd.f32 %v358, %v375
        %s380 = sld [smem:[#allocation3 + $0xf]]
        %v381 = vstv %s380
        %v382 = vmul.f32 %v228, %v381
        %v383 = vmul.f32 %v229, %v381
        %v384 = vmul.f32 %v230, %v381
        %v388 = vrot.slane %v382, 2
        %v389 = vrot.slane %v383, 2
        %v390 = vsel %vm263, %v388, %v389
        %v391 = vrot.slane %v384, 2
        %v392 = vsel %vm263, %v389, %v391
        %393 = vrot.lane.b32.xlu0 %v390, 127
        %v394 = vpop.permute.xlu0 %393
        %395 = vrot.lane.b32.xlu0 %v392, 127
        %v396 = vpop.permute.xlu0 %395
        %v399 = vadd.f32 %v378, %v394
        %v400 = vadd.f32 %v379, %v396
        %s401 = sld [smem:[#allocation3 + $0x16]]
        %v402 = vstv %s401
        %v403 = vmul.f32 %v228, %v402
        %v404 = vmul.f32 %v229, %v402
        %v405 = vmul.f32 %v230, %v402
        %v409 = vrot.slane %v403, 3
        %v410 = vrot.slane %v404, 3
        %v411 = vsel %vm281, %v409, %v410
        %v412 = vrot.slane %v405, 3
        %v413 = vsel %vm281, %v410, %v412
        %414 = vrot.lane.b32.xlu0 %v411, 127
        %v415 = vpop.permute.xlu0 %414
        %416 = vrot.lane.b32.xlu0 %v413, 127
        %v417 = vpop.permute.xlu0 %416
        %v420 = vadd.f32 %v399, %v415
        %v421 = vadd.f32 %v400, %v417
        %s422 = sld [smem:[#allocation3 + $0x1d]]
        %v423 = vstv %s422
        %v424 = vmul.f32 %v228, %v423
        %v425 = vmul.f32 %v229, %v423
        %v426 = vmul.f32 %v230, %v423
        %v430 = vrot.slane %v424, 4
        %v431 = vrot.slane %v425, 4
        %v432 = vsel %vm299, %v430, %v431
        %v433 = vrot.slane %v426, 4
        %v434 = vsel %vm299, %v431, %v433
        %435 = vrot.lane.b32.xlu0 %v432, 127
        %v436 = vpop.permute.xlu0 %435
        %437 = vrot.lane.b32.xlu0 %v434, 127
        %v438 = vpop.permute.xlu0 %437
        %v441 = vadd.f32 %v420, %v436
        %v442 = vadd.f32 %v421, %v438
        %s443 = sld [smem:[#allocation3 + $0x24]]
        %v444 = vstv %s443
        %v445 = vmul.f32 %v228, %v444
        %v446 = vmul.f32 %v229, %v444
        %v447 = vmul.f32 %v230, %v444
        %v451 = vrot.slane %v445, 5
        %v452 = vrot.slane %v446, 5
        %v453 = vsel %vm317, %v451, %v452
        %v454 = vrot.slane %v447, 5
        %v455 = vsel %vm317, %v452, %v454
        %456 = vrot.lane.b32.xlu0 %v453, 127
        %v457 = vpop.permute.xlu0 %456
        %458 = vrot.lane.b32.xlu0 %v455, 127
        %v459 = vpop.permute.xlu0 %458
        %v462 = vadd.f32 %v441, %v457
        %v463 = vadd.f32 %v442, %v459
        %s464 = sld [smem:[#allocation3 + $0x2b]]
        %v465 = vstv %s464
        %v466 = vmul.f32 %v228, %v465
        %v467 = vmul.f32 %v229, %v465
        %v468 = vmul.f32 %v230, %v465
        %v472 = vrot.slane %v466, 6
        %v473 = vrot.slane %v467, 6
        %v474 = vsel %vm335, %v472, %v473
        %v475 = vrot.slane %v468, 6
        %v476 = vsel %vm335, %v473, %v475
        %477 = vrot.lane.b32.xlu0 %v474, 127
        %v478 = vpop.permute.xlu0 %477
        %479 = vrot.lane.b32.xlu0 %v476, 127
        %v480 = vpop.permute.xlu0 %479
        %v483 = vadd.f32 %v462, %v478
        %v484 = vadd.f32 %v463, %v480
        %s485 = sld [smem:[#allocation3 + $0x2]]
        %v486 = vstv %s485
        %v487 = vmul.f32 %v228, %v486
        %v488 = vmul.f32 %v229, %v486
        %491 = vrot.lane.b32.xlu0 %v487, 126
        %v492 = vpop.permute.xlu0 %491
        %493 = vrot.lane.b32.xlu0 %v488, 126
        %v494 = vpop.permute.xlu0 %493
        %v497 = vadd.f32 %v483, %v492
        %v498 = vadd.f32 %v484, %v494
        %s499 = sld [smem:[#allocation3 + $0x9]]
        %v500 = vstv %s499
        %v501 = vmul.f32 %v228, %v500
        %v502 = vmul.f32 %v229, %v500
        %v503 = vmul.f32 %v230, %v500
        %v507 = vrot.slane %v501, 1
        %v508 = vrot.slane %v502, 1
        %v509 = vsel %vm245, %v507, %v508
        %v510 = vrot.slane %v503, 1
        %v511 = vsel %vm245, %v508, %v510
        %512 = vrot.lane.b32.xlu0 %v509, 126
        %v513 = vpop.permute.xlu0 %512
        %514 = vrot.lane.b32.xlu0 %v511, 126
        %v515 = vpop.permute.xlu0 %514
        %v518 = vadd.f32 %v497, %v513
        %v519 = vadd.f32 %v498, %v515
        %s520 = sld [smem:[#allocation3 + $0x10]]
        %v521 = vstv %s520
        %v522 = vmul.f32 %v228, %v521
        %v523 = vmul.f32 %v229, %v521
        %v524 = vmul.f32 %v230, %v521
        %v528 = vrot.slane %v522, 2
        %v529 = vrot.slane %v523, 2
        %v530 = vsel %vm263, %v528, %v529
        %v531 = vrot.slane %v524, 2
        %v532 = vsel %vm263, %v529, %v531
        %533 = vrot.lane.b32.xlu0 %v530, 126
        %v534 = vpop.permute.xlu0 %533
        %535 = vrot.lane.b32.xlu0 %v532, 126
        %v536 = vpop.permute.xlu0 %535
        %v539 = vadd.f32 %v518, %v534
        %v540 = vadd.f32 %v519, %v536
        %s541 = sld [smem:[#allocation3 + $0x17]]
        %v542 = vstv %s541
        %v543 = vmul.f32 %v228, %v542
        %v544 = vmul.f32 %v229, %v542
        %v545 = vmul.f32 %v230, %v542
        %v549 = vrot.slane %v543, 3
        %v550 = vrot.slane %v544, 3
        %v551 = vsel %vm281, %v549, %v550
        %v552 = vrot.slane %v545, 3
        %v553 = vsel %vm281, %v550, %v552
        %554 = vrot.lane.b32.xlu0 %v551, 126
        %v555 = vpop.permute.xlu0 %554
        %556 = vrot.lane.b32.xlu0 %v553, 126
        %v557 = vpop.permute.xlu0 %556
        %v560 = vadd.f32 %v539, %v555
        %v561 = vadd.f32 %v540, %v557
        %s562 = sld [smem:[#allocation3 + $0x1e]]
        %v563 = vstv %s562
        %v564 = vmul.f32 %v228, %v563
        %v565 = vmul.f32 %v229, %v563
        %v566 = vmul.f32 %v230, %v563
        %v570 = vrot.slane %v564, 4
        %v571 = vrot.slane %v565, 4
        %v572 = vsel %vm299, %v570, %v571
        %v573 = vrot.slane %v566, 4
        %v574 = vsel %vm299, %v571, %v573
        %575 = vrot.lane.b32.xlu0 %v572, 126
        %v576 = vpop.permute.xlu0 %575
        %577 = vrot.lane.b32.xlu0 %v574, 126
        %v578 = vpop.permute.xlu0 %577
        %v581 = vadd.f32 %v560, %v576
        %v582 = vadd.f32 %v561, %v578
        %s583 = sld [smem:[#allocation3 + $0x25]]
        %v584 = vstv %s583
        %v585 = vmul.f32 %v228, %v584
        %v586 = vmul.f32 %v229, %v584
        %v587 = vmul.f32 %v230, %v584
        %v591 = vrot.slane %v585, 5
        %v592 = vrot.slane %v586, 5
        %v593 = vsel %vm317, %v591, %v592
        %v594 = vrot.slane %v587, 5
        %v595 = vsel %vm317, %v592, %v594
        %596 = vrot.lane.b32.xlu0 %v593, 126
        %v597 = vpop.permute.xlu0 %596
        %598 = vrot.lane.b32.xlu0 %v595, 126
        %v599 = vpop.permute.xlu0 %598
        %v602 = vadd.f32 %v581, %v597
        %v603 = vadd.f32 %v582, %v599
        %s604 = sld [smem:[#allocation3 + $0x2c]]
        %v605 = vstv %s604
        %v606 = vmul.f32 %v228, %v605
        %v607 = vmul.f32 %v229, %v605
        %v608 = vmul.f32 %v230, %v605
        %v612 = vrot.slane %v606, 6
        %v613 = vrot.slane %v607, 6
        %v614 = vsel %vm335, %v612, %v613
        %v615 = vrot.slane %v608, 6
        %v616 = vsel %vm335, %v613, %v615
        %617 = vrot.lane.b32.xlu0 %v614, 126
        %v618 = vpop.permute.xlu0 %617
        %619 = vrot.lane.b32.xlu0 %v616, 126
        %v620 = vpop.permute.xlu0 %619
        %v623 = vadd.f32 %v602, %v618
        %v624 = vadd.f32 %v603, %v620
        %s625 = sld [smem:[#allocation3 + $0x3]]
        %v626 = vstv %s625
        %v627 = vmul.f32 %v228, %v626
        %v628 = vmul.f32 %v229, %v626
        %631 = vrot.lane.b32.xlu0 %v627, 125
        %v632 = vpop.permute.xlu0 %631
        %633 = vrot.lane.b32.xlu0 %v628, 125
        %v634 = vpop.permute.xlu0 %633
        %v637 = vadd.f32 %v623, %v632
        %v638 = vadd.f32 %v624, %v634
        %s639 = sld [smem:[#allocation3 + $0xa]]
        %v640 = vstv %s639
        %v641 = vmul.f32 %v228, %v640
        %v642 = vmul.f32 %v229, %v640
        %v643 = vmul.f32 %v230, %v640
        %v647 = vrot.slane %v641, 1
        %v648 = vrot.slane %v642, 1
        %v649 = vsel %vm245, %v647, %v648
        %v650 = vrot.slane %v643, 1
        %v651 = vsel %vm245, %v648, %v650
        %652 = vrot.lane.b32.xlu0 %v649, 125
        %v653 = vpop.permute.xlu0 %652
        %654 = vrot.lane.b32.xlu0 %v651, 125
        %v655 = vpop.permute.xlu0 %654
        %v658 = vadd.f32 %v637, %v653
        %v659 = vadd.f32 %v638, %v655
        %s660 = sld [smem:[#allocation3 + $0x11]]
        %v661 = vstv %s660
        %v662 = vmul.f32 %v228, %v661
        %v663 = vmul.f32 %v229, %v661
        %v664 = vmul.f32 %v230, %v661
        %v668 = vrot.slane %v662, 2
        %v669 = vrot.slane %v663, 2
        %v670 = vsel %vm263, %v668, %v669
        %v671 = vrot.slane %v664, 2
        %v672 = vsel %vm263, %v669, %v671
        %673 = vrot.lane.b32.xlu0 %v670, 125
        %v674 = vpop.permute.xlu0 %673
        %675 = vrot.lane.b32.xlu0 %v672, 125
        %v676 = vpop.permute.xlu0 %675
        %v679 = vadd.f32 %v658, %v674
        %v680 = vadd.f32 %v659, %v676
        %s681 = sld [smem:[#allocation3 + $0x18]]
        %v682 = vstv %s681
        %v683 = vmul.f32 %v228, %v682
        %v684 = vmul.f32 %v229, %v682
        %v685 = vmul.f32 %v230, %v682
        %v689 = vrot.slane %v683, 3
        %v690 = vrot.slane %v684, 3
        %v691 = vsel %vm281, %v689, %v690
        %v692 = vrot.slane %v685, 3
        %v693 = vsel %vm281, %v690, %v692
        %694 = vrot.lane.b32.xlu0 %v691, 125
        %v695 = vpop.permute.xlu0 %694
        %696 = vrot.lane.b32.xlu0 %v693, 125
        %v697 = vpop.permute.xlu0 %696
        %v700 = vadd.f32 %v679, %v695
        %v701 = vadd.f32 %v680, %v697
        %s702 = sld [smem:[#allocation3 + $0x1f]]
        %v703 = vstv %s702
        %v704 = vmul.f32 %v228, %v703
        %v705 = vmul.f32 %v229, %v703
        %v706 = vmul.f32 %v230, %v703
        %v710 = vrot.slane %v704, 4
        %v711 = vrot.slane %v705, 4
        %v712 = vsel %vm299, %v710, %v711
        %v713 = vrot.slane %v706, 4
        %v714 = vsel %vm299, %v711, %v713
        %715 = vrot.lane.b32.xlu0 %v712, 125
        %v716 = vpop.permute.xlu0 %715
        %717 = vrot.lane.b32.xlu0 %v714, 125
        %v718 = vpop.permute.xlu0 %717
        %v721 = vadd.f32 %v700, %v716
        %v722 = vadd.f32 %v701, %v718
        %s723 = sld [smem:[#allocation3 + $0x26]]
        %v724 = vstv %s723
        %v725 = vmul.f32 %v228, %v724
        %v726 = vmul.f32 %v229, %v724
        %v727 = vmul.f32 %v230, %v724
        %v731 = vrot.slane %v725, 5
        %v732 = vrot.slane %v726, 5
        %v733 = vsel %vm317, %v731, %v732
        %v734 = vrot.slane %v727, 5
        %v735 = vsel %vm317, %v732, %v734
        %736 = vrot.lane.b32.xlu0 %v733, 125
        %v737 = vpop.permute.xlu0 %736
        %738 = vrot.lane.b32.xlu0 %v735, 125
        %v739 = vpop.permute.xlu0 %738
        %v742 = vadd.f32 %v721, %v737
        %v743 = vadd.f32 %v722, %v739
        %s744 = sld [smem:[#allocation3 + $0x2d]]
        %v745 = vstv %s744
        %v746 = vmul.f32 %v228, %v745
        %v747 = vmul.f32 %v229, %v745
        %v748 = vmul.f32 %v230, %v745
        %v752 = vrot.slane %v746, 6
        %v753 = vrot.slane %v747, 6
        %v754 = vsel %vm335, %v752, %v753
        %v755 = vrot.slane %v748, 6
        %v756 = vsel %vm335, %v753, %v755
        %757 = vrot.lane.b32.xlu0 %v754, 125
        %v758 = vpop.permute.xlu0 %757
        %759 = vrot.lane.b32.xlu0 %v756, 125
        %v760 = vpop.permute.xlu0 %759
        %v763 = vadd.f32 %v742, %v758
        %v764 = vadd.f32 %v743, %v760
        %s765 = sld [smem:[#allocation3 + $0x4]]
        %v766 = vstv %s765
        %v767 = vmul.f32 %v228, %v766
        %v768 = vmul.f32 %v229, %v766
        %771 = vrot.lane.b32.xlu0 %v767, 124
        %v772 = vpop.permute.xlu0 %771
        %773 = vrot.lane.b32.xlu0 %v768, 124
        %v774 = vpop.permute.xlu0 %773
        %v777 = vadd.f32 %v763, %v772
        %v778 = vadd.f32 %v764, %v774
        %s779 = sld [smem:[#allocation3 + $0xb]]
        %v780 = vstv %s779
        %v781 = vmul.f32 %v228, %v780
        %v782 = vmul.f32 %v229, %v780
        %v783 = vmul.f32 %v230, %v780
        %v787 = vrot.slane %v781, 1
        %v788 = vrot.slane %v782, 1
        %v789 = vsel %vm245, %v787, %v788
        %v790 = vrot.slane %v783, 1
        %v791 = vsel %vm245, %v788, %v790
        %792 = vrot.lane.b32.xlu0 %v789, 124
        %v793 = vpop.permute.xlu0 %792
        %794 = vrot.lane.b32.xlu0 %v791, 124
        %v795 = vpop.permute.xlu0 %794
        %v798 = vadd.f32 %v777, %v793
        %v799 = vadd.f32 %v778, %v795
        %s800 = sld [smem:[#allocation3 + $0x12]]
        %v801 = vstv %s800
        %v802 = vmul.f32 %v228, %v801
        %v803 = vmul.f32 %v229, %v801
        %v804 = vmul.f32 %v230, %v801
        %v808 = vrot.slane %v802, 2
        %v809 = vrot.slane %v803, 2
        %v810 = vsel %vm263, %v808, %v809
        %v811 = vrot.slane %v804, 2
        %v812 = vsel %vm263, %v809, %v811
        %813 = vrot.lane.b32.xlu0 %v810, 124
        %v814 = vpop.permute.xlu0 %813
        %815 = vrot.lane.b32.xlu0 %v812, 124
        %v816 = vpop.permute.xlu0 %815
        %v819 = vadd.f32 %v798, %v814
        %v820 = vadd.f32 %v799, %v816
        %s821 = sld [smem:[#allocation3 + $0x19]]
        %v822 = vstv %s821
        %v823 = vmul.f32 %v228, %v822
        %v824 = vmul.f32 %v229, %v822
        %v825 = vmul.f32 %v230, %v822
        %v829 = vrot.slane %v823, 3
        %v830 = vrot.slane %v824, 3
        %v831 = vsel %vm281, %v829, %v830
        %v832 = vrot.slane %v825, 3
        %v833 = vsel %vm281, %v830, %v832
        %834 = vrot.lane.b32.xlu0 %v831, 124
        %v835 = vpop.permute.xlu0 %834
        %836 = vrot.lane.b32.xlu0 %v833, 124
        %v837 = vpop.permute.xlu0 %836
        %v840 = vadd.f32 %v819, %v835
        %v841 = vadd.f32 %v820, %v837
        %s842 = sld [smem:[#allocation3 + $0x20]]
        %v843 = vstv %s842
        %v844 = vmul.f32 %v228, %v843
        %v845 = vmul.f32 %v229, %v843
        %v846 = vmul.f32 %v230, %v843
        %v850 = vrot.slane %v844, 4
        %v851 = vrot.slane %v845, 4
        %v852 = vsel %vm299, %v850, %v851
        %v853 = vrot.slane %v846, 4
        %v854 = vsel %vm299, %v851, %v853
        %855 = vrot.lane.b32.xlu0 %v852, 124
        %v856 = vpop.permute.xlu0 %855
        %857 = vrot.lane.b32.xlu0 %v854, 124
        %v858 = vpop.permute.xlu0 %857
        %v861 = vadd.f32 %v840, %v856
        %v862 = vadd.f32 %v841, %v858
        %s863 = sld [smem:[#allocation3 + $0x27]]
        %v864 = vstv %s863
        %v865 = vmul.f32 %v228, %v864
        %v866 = vmul.f32 %v229, %v864
        %v867 = vmul.f32 %v230, %v864
        %v871 = vrot.slane %v865, 5
        %v872 = vrot.slane %v866, 5
        %v873 = vsel %vm317, %v871, %v872
        %v874 = vrot.slane %v867, 5
        %v875 = vsel %vm317, %v872, %v874
        %876 = vrot.lane.b32.xlu0 %v873, 124
        %v877 = vpop.permute.xlu0 %876
        %878 = vrot.lane.b32.xlu0 %v875, 124
        %v879 = vpop.permute.xlu0 %878
        %v882 = vadd.f32 %v861, %v877
        %v883 = vadd.f32 %v862, %v879
        %s884 = sld [smem:[#allocation3 + $0x2e]]
        %v885 = vstv %s884
        %v886 = vmul.f32 %v228, %v885
        %v887 = vmul.f32 %v229, %v885
        %v888 = vmul.f32 %v230, %v885
        %v892 = vrot.slane %v886, 6
        %v893 = vrot.slane %v887, 6
        %v894 = vsel %vm335, %v892, %v893
        %v895 = vrot.slane %v888, 6
        %v896 = vsel %vm335, %v893, %v895
        %897 = vrot.lane.b32.xlu0 %v894, 124
        %v898 = vpop.permute.xlu0 %897
        %899 = vrot.lane.b32.xlu0 %v896, 124
        %v900 = vpop.permute.xlu0 %899
        %v903 = vadd.f32 %v882, %v898
        %v904 = vadd.f32 %v883, %v900
        %s905 = sld [smem:[#allocation3 + $0x5]]
        %v906 = vstv %s905
        %v907 = vmul.f32 %v228, %v906
        %v908 = vmul.f32 %v229, %v906
        %911 = vrot.lane.b32.xlu0 %v907, 123
        %v912 = vpop.permute.xlu0 %911
        %913 = vrot.lane.b32.xlu0 %v908, 123
        %v914 = vpop.permute.xlu0 %913
        %v917 = vadd.f32 %v903, %v912
        %v918 = vadd.f32 %v904, %v914
        %s919 = sld [smem:[#allocation3 + $0xc]]
        %v920 = vstv %s919
        %v921 = vmul.f32 %v228, %v920
        %v922 = vmul.f32 %v229, %v920
        %v923 = vmul.f32 %v230, %v920
        %v927 = vrot.slane %v921, 1
        %v928 = vrot.slane %v922, 1
        %v929 = vsel %vm245, %v927, %v928
        %v930 = vrot.slane %v923, 1
        %v931 = vsel %vm245, %v928, %v930
        %932 = vrot.lane.b32.xlu0 %v929, 123
        %v933 = vpop.permute.xlu0 %932
        %934 = vrot.lane.b32.xlu0 %v931, 123
        %v935 = vpop.permute.xlu0 %934
        %v938 = vadd.f32 %v917, %v933
        %v939 = vadd.f32 %v918, %v935
        %s940 = sld [smem:[#allocation3 + $0x13]]
        %v941 = vstv %s940
        %v942 = vmul.f32 %v228, %v941
        %v943 = vmul.f32 %v229, %v941
        %v944 = vmul.f32 %v230, %v941
        %v948 = vrot.slane %v942, 2
        %v949 = vrot.slane %v943, 2
        %v950 = vsel %vm263, %v948, %v949
        %v951 = vrot.slane %v944, 2
        %v952 = vsel %vm263, %v949, %v951
        %953 = vrot.lane.b32.xlu0 %v950, 123
        %v954 = vpop.permute.xlu0 %953
        %955 = vrot.lane.b32.xlu0 %v952, 123
        %v956 = vpop.permute.xlu0 %955
        %v959 = vadd.f32 %v938, %v954
        %v960 = vadd.f32 %v939, %v956
        %s961 = sld [smem:[#allocation3 + $0x1a]]
        %v962 = vstv %s961
        %v963 = vmul.f32 %v228, %v962
        %v964 = vmul.f32 %v229, %v962
        %v965 = vmul.f32 %v230, %v962
        %v969 = vrot.slane %v963, 3
        %v970 = vrot.slane %v964, 3
        %v971 = vsel %vm281, %v969, %v970
        %v972 = vrot.slane %v965, 3
        %v973 = vsel %vm281, %v970, %v972
        %974 = vrot.lane.b32.xlu0 %v971, 123
        %v975 = vpop.permute.xlu0 %974
        %976 = vrot.lane.b32.xlu0 %v973, 123
        %v977 = vpop.permute.xlu0 %976
        %v980 = vadd.f32 %v959, %v975
        %v981 = vadd.f32 %v960, %v977
        %s982 = sld [smem:[#allocation3 + $0x21]]
        %v983 = vstv %s982
        %v984 = vmul.f32 %v228, %v983
        %v985 = vmul.f32 %v229, %v983
        %v986 = vmul.f32 %v230, %v983
        %v990 = vrot.slane %v984, 4
        %v991 = vrot.slane %v985, 4
        %v992 = vsel %vm299, %v990, %v991
        %v993 = vrot.slane %v986, 4
        %v994 = vsel %vm299, %v991, %v993
        %995 = vrot.lane.b32.xlu0 %v992, 123
        %v996 = vpop.permute.xlu0 %995
        %997 = vrot.lane.b32.xlu0 %v994, 123
        %v998 = vpop.permute.xlu0 %997
        %v1001 = vadd.f32 %v980, %v996
        %v1002 = vadd.f32 %v981, %v998
        %s1003 = sld [smem:[#allocation3 + $0x28]]
        %v1004 = vstv %s1003
        %v1005 = vmul.f32 %v228, %v1004
        %v1006 = vmul.f32 %v229, %v1004
        %v1007 = vmul.f32 %v230, %v1004
        %v1011 = vrot.slane %v1005, 5
        %v1012 = vrot.slane %v1006, 5
        %v1013 = vsel %vm317, %v1011, %v1012
        %v1014 = vrot.slane %v1007, 5
        %v1015 = vsel %vm317, %v1012, %v1014
        %1016 = vrot.lane.b32.xlu0 %v1013, 123
        %v1017 = vpop.permute.xlu0 %1016
        %1018 = vrot.lane.b32.xlu0 %v1015, 123
        %v1019 = vpop.permute.xlu0 %1018
        %v1022 = vadd.f32 %v1001, %v1017
        %v1023 = vadd.f32 %v1002, %v1019
        %s1024 = sld [smem:[#allocation3 + $0x2f]]
        %v1025 = vstv %s1024
        %v1026 = vmul.f32 %v228, %v1025
        %v1027 = vmul.f32 %v229, %v1025
        %v1028 = vmul.f32 %v230, %v1025
        %v1032 = vrot.slane %v1026, 6
        %v1033 = vrot.slane %v1027, 6
        %v1034 = vsel %vm335, %v1032, %v1033
        %v1035 = vrot.slane %v1028, 6
        %v1036 = vsel %vm335, %v1033, %v1035
        %1037 = vrot.lane.b32.xlu0 %v1034, 123
        %v1038 = vpop.permute.xlu0 %1037
        %1039 = vrot.lane.b32.xlu0 %v1036, 123
        %v1040 = vpop.permute.xlu0 %1039
        %v1043 = vadd.f32 %v1022, %v1038
        %v1044 = vadd.f32 %v1023, %v1040
        %s1045 = sld [smem:[#allocation3 + $0x6]]
        %v1046 = vstv %s1045
        %v1047 = vmul.f32 %v228, %v1046
        %v1048 = vmul.f32 %v229, %v1046
        %1051 = vrot.lane.b32.xlu0 %v1047, 122
        %v1052 = vpop.permute.xlu0 %1051
        %1053 = vrot.lane.b32.xlu0 %v1048, 122
        %v1054 = vpop.permute.xlu0 %1053
        %v1057 = vadd.f32 %v1043, %v1052
        %v1058 = vadd.f32 %v1044, %v1054
        %s1059 = sld [smem:[#allocation3 + $0xd]]
        %v1060 = vstv %s1059
        %v1061 = vmul.f32 %v228, %v1060
        %v1062 = vmul.f32 %v229, %v1060
        %v1063 = vmul.f32 %v230, %v1060
        %v1067 = vrot.slane %v1061, 1
        %v1068 = vrot.slane %v1062, 1
        %v1069 = vsel %vm245, %v1067, %v1068
        %v1070 = vrot.slane %v1063, 1
        %v1071 = vsel %vm245, %v1068, %v1070
        %1072 = vrot.lane.b32.xlu0 %v1069, 122
        %v1073 = vpop.permute.xlu0 %1072
        %1074 = vrot.lane.b32.xlu0 %v1071, 122
        %v1075 = vpop.permute.xlu0 %1074
        %v1078 = vadd.f32 %v1057, %v1073
        %v1079 = vadd.f32 %v1058, %v1075
        %s1080 = sld [smem:[#allocation3 + $0x14]]
        %v1081 = vstv %s1080
        %v1082 = vmul.f32 %v228, %v1081
        %v1083 = vmul.f32 %v229, %v1081
        %v1084 = vmul.f32 %v230, %v1081
        %v1088 = vrot.slane %v1082, 2
        %v1089 = vrot.slane %v1083, 2
        %v1090 = vsel %vm263, %v1088, %v1089
        %v1091 = vrot.slane %v1084, 2
        %v1092 = vsel %vm263, %v1089, %v1091
        %1093 = vrot.lane.b32.xlu0 %v1090, 122
        %v1094 = vpop.permute.xlu0 %1093
        %1095 = vrot.lane.b32.xlu0 %v1092, 122
        %v1096 = vpop.permute.xlu0 %1095
        %v1099 = vadd.f32 %v1078, %v1094
        %v1100 = vadd.f32 %v1079, %v1096
        %s1101 = sld [smem:[#allocation3 + $0x1b]]
        %v1102 = vstv %s1101
        %v1103 = vmul.f32 %v228, %v1102
        %v1104 = vmul.f32 %v229, %v1102
        %v1105 = vmul.f32 %v230, %v1102
        %v1109 = vrot.slane %v1103, 3
        %v1110 = vrot.slane %v1104, 3
        %v1111 = vsel %vm281, %v1109, %v1110
        %v1112 = vrot.slane %v1105, 3
        %v1113 = vsel %vm281, %v1110, %v1112
        %1114 = vrot.lane.b32.xlu0 %v1111, 122
        %v1115 = vpop.permute.xlu0 %1114
        %1116 = vrot.lane.b32.xlu0 %v1113, 122
        %v1117 = vpop.permute.xlu0 %1116
        %v1120 = vadd.f32 %v1099, %v1115
        %v1121 = vadd.f32 %v1100, %v1117
        %s1122 = sld [smem:[#allocation3 + $0x22]]
        %v1123 = vstv %s1122
        %v1124 = vmul.f32 %v228, %v1123
        %v1125 = vmul.f32 %v229, %v1123
        %v1126 = vmul.f32 %v230, %v1123
        %v1130 = vrot.slane %v1124, 4
        %v1131 = vrot.slane %v1125, 4
        %v1132 = vsel %vm299, %v1130, %v1131
        %v1133 = vrot.slane %v1126, 4
        %v1134 = vsel %vm299, %v1131, %v1133
        %1135 = vrot.lane.b32.xlu0 %v1132, 122
        %v1136 = vpop.permute.xlu0 %1135
        %1137 = vrot.lane.b32.xlu0 %v1134, 122
        %v1138 = vpop.permute.xlu0 %1137
        %v1141 = vadd.f32 %v1120, %v1136
        %v1142 = vadd.f32 %v1121, %v1138
        %s1143 = sld [smem:[#allocation3 + $0x29]]
        %v1144 = vstv %s1143
        %v1145 = vmul.f32 %v228, %v1144
        %v1146 = vmul.f32 %v229, %v1144
        %v1147 = vmul.f32 %v230, %v1144
        %v1151 = vrot.slane %v1145, 5
        %v1152 = vrot.slane %v1146, 5
        %v1153 = vsel %vm317, %v1151, %v1152
        %v1154 = vrot.slane %v1147, 5
        %v1155 = vsel %vm317, %v1152, %v1154
        %1156 = vrot.lane.b32.xlu0 %v1153, 122
        %v1157 = vpop.permute.xlu0 %1156
        %1158 = vrot.lane.b32.xlu0 %v1155, 122
        %v1159 = vpop.permute.xlu0 %1158
        %v1162 = vadd.f32 %v1141, %v1157
        %v1163 = vadd.f32 %v1142, %v1159
        %s1164 = sld [smem:[#allocation3 + $0x30]]
        %v1165 = vstv %s1164
        %v1166 = vmul.f32 %v228, %v1165
        %v1167 = vmul.f32 %v229, %v1165
        %v1168 = vmul.f32 %v230, %v1165
        %v1172 = vrot.slane %v1166, 6
        %v1173 = vrot.slane %v1167, 6
        %v1174 = vsel %vm335, %v1172, %v1173
        %v1175 = vrot.slane %v1168, 6
        %v1176 = vsel %vm335, %v1173, %v1175
        %1177 = vrot.lane.b32.xlu0 %v1174, 122
        %v1178 = vpop.permute.xlu0 %1177
        %1179 = vrot.lane.b32.xlu0 %v1176, 122
        %v1180 = vpop.permute.xlu0 %1179
        %v1183 = vadd.f32 %v1162, %v1178
        %v1184 = vadd.f32 %v1163, %v1180
        %v1185 = vld [vmem:[%s225] sm:$0xff]
        %v1186 = vld [vmem:[%s225 + $0x8] sm:$0xff]
        %v1187 = vld [vmem:[%s225 + $0x10] sm:$0x3f]
        %s1188 = sld [smem:[#allocation3 + $0x31]]
        %v1189 = vstv %s1188
        %v1190 = vmul.f32 %v1185, %v1189
        %v1191 = vmul.f32 %v1186, %v1189
        %v1192 = vadd.f32 %v1183, %v1190
        %v1193 = vadd.f32 %v1184, %v1191
        %s1194 = sld [smem:[#allocation3 + $0x38]]
        %v1195 = vstv %s1194
        %v1196 = vmul.f32 %v1185, %v1195
        %v1197 = vmul.f32 %v1186, %v1195
        %v1198 = vmul.f32 %v1187, %v1195
        %v1202 = vrot.slane %v1196, 1
        %v1203 = vrot.slane %v1197, 1
        %v1204 = vsel %vm245, %v1202, %v1203
        %v1205 = vrot.slane %v1198, 1
        %v1206 = vsel %vm245, %v1203, %v1205
        %v1209 = vadd.f32 %v1192, %v1204
        %v1210 = vadd.f32 %v1193, %v1206
        %s1211 = sld [smem:[#allocation3 + $0x3f]]
        %v1212 = vstv %s1211
        %v1213 = vmul.f32 %v1185, %v1212
        %v1214 = vmul.f32 %v1186, %v1212
        %v1215 = vmul.f32 %v1187, %v1212
        %v1219 = vrot.slane %v1213, 2
        %v1220 = vrot.slane %v1214, 2
        %v1221 = vsel %vm263, %v1219, %v1220
        %v1222 = vrot.slane %v1215, 2
        %v1223 = vsel %vm263, %v1220, %v1222
        %v1226 = vadd.f32 %v1209, %v1221
        %v1227 = vadd.f32 %v1210, %v1223
        %s1228 = sld [smem:[#allocation3 + $0x46]]
        %v1229 = vstv %s1228
        %v1230 = vmul.f32 %v1185, %v1229
        %v1231 = vmul.f32 %v1186, %v1229
        %v1232 = vmul.f32 %v1187, %v1229
        %v1236 = vrot.slane %v1230, 3
        %v1237 = vrot.slane %v1231, 3
        %v1238 = vsel %vm281, %v1236, %v1237
        %v1239 = vrot.slane %v1232, 3
        %v1240 = vsel %vm281, %v1237, %v1239
        %v1243 = vadd.f32 %v1226, %v1238
        %v1244 = vadd.f32 %v1227, %v1240
        %s1245 = sld [smem:[#allocation3 + $0x4d]]
        %v1246 = vstv %s1245
        %v1247 = vmul.f32 %v1185, %v1246
        %v1248 = vmul.f32 %v1186, %v1246
        %v1249 = vmul.f32 %v1187, %v1246
        %v1253 = vrot.slane %v1247, 4
        %v1254 = vrot.slane %v1248, 4
        %v1255 = vsel %vm299, %v1253, %v1254
        %v1256 = vrot.slane %v1249, 4
        %v1257 = vsel %vm299, %v1254, %v1256
        %v1260 = vadd.f32 %v1243, %v1255
        %v1261 = vadd.f32 %v1244, %v1257
        %s1262 = sld [smem:[#allocation3 + $0x54]]
        %v1263 = vstv %s1262
        %v1264 = vmul.f32 %v1185, %v1263
        %v1265 = vmul.f32 %v1186, %v1263
        %v1266 = vmul.f32 %v1187, %v1263
        %v1270 = vrot.slane %v1264, 5
        %v1271 = vrot.slane %v1265, 5
        %v1272 = vsel %vm317, %v1270, %v1271
        %v1273 = vrot.slane %v1266, 5
        %v1274 = vsel %vm317, %v1271, %v1273
        %v1277 = vadd.f32 %v1260, %v1272
        %v1278 = vadd.f32 %v1261, %v1274
        %s1279 = sld [smem:[#allocation3 + $0x5b]]
        %v1280 = vstv %s1279
        %v1281 = vmul.f32 %v1185, %v1280
        %v1282 = vmul.f32 %v1186, %v1280
        %v1283 = vmul.f32 %v1187, %v1280
        %v1287 = vrot.slane %v1281, 6
        %v1288 = vrot.slane %v1282, 6
        %v1289 = vsel %vm335, %v1287, %v1288
        %v1290 = vrot.slane %v1283, 6
        %v1291 = vsel %vm335, %v1288, %v1290
        %v1294 = vadd.f32 %v1277, %v1289
        %v1295 = vadd.f32 %v1278, %v1291
        %s1296 = sld [smem:[#allocation3 + $0x32]]
        %v1297 = vstv %s1296
        %v1298 = vmul.f32 %v1185, %v1297
        %v1299 = vmul.f32 %v1186, %v1297
        %1302 = vrot.lane.b32.xlu0 %v1298, 127
        %v1303 = vpop.permute.xlu0 %1302
        %1304 = vrot.lane.b32.xlu0 %v1299, 127
        %v1305 = vpop.permute.xlu0 %1304
        %v1308 = vadd.f32 %v1294, %v1303
        %v1309 = vadd.f32 %v1295, %v1305
        %s1310 = sld [smem:[#allocation3 + $0x39]]
        %v1311 = vstv %s1310
        %v1312 = vmul.f32 %v1185, %v1311
        %v1313 = vmul.f32 %v1186, %v1311
        %v1314 = vmul.f32 %v1187, %v1311
        %v1318 = vrot.slane %v1312, 1
        %v1319 = vrot.slane %v1313, 1
        %v1320 = vsel %vm245, %v1318, %v1319
        %v1321 = vrot.slane %v1314, 1
        %v1322 = vsel %vm245, %v1319, %v1321
        %1323 = vrot.lane.b32.xlu0 %v1320, 127
        %v1324 = vpop.permute.xlu0 %1323
        %1325 = vrot.lane.b32.xlu0 %v1322, 127
        %v1326 = vpop.permute.xlu0 %1325
        %v1329 = vadd.f32 %v1308, %v1324
        %v1330 = vadd.f32 %v1309, %v1326
        %s1331 = sld [smem:[#allocation3 + $0x40]]
        %v1332 = vstv %s1331
        %v1333 = vmul.f32 %v1185, %v1332
        %v1334 = vmul.f32 %v1186, %v1332
        %v1335 = vmul.f32 %v1187, %v1332
        %v1339 = vrot.slane %v1333, 2
        %v1340 = vrot.slane %v1334, 2
        %v1341 = vsel %vm263, %v1339, %v1340
        %v1342 = vrot.slane %v1335, 2
        %v1343 = vsel %vm263, %v1340, %v1342
        %1344 = vrot.lane.b32.xlu0 %v1341, 127
        %v1345 = vpop.permute.xlu0 %1344
        %1346 = vrot.lane.b32.xlu0 %v1343, 127
        %v1347 = vpop.permute.xlu0 %1346
        %v1350 = vadd.f32 %v1329, %v1345
        %v1351 = vadd.f32 %v1330, %v1347
        %s1352 = sld [smem:[#allocation3 + $0x47]]
        %v1353 = vstv %s1352
        %v1354 = vmul.f32 %v1185, %v1353
        %v1355 = vmul.f32 %v1186, %v1353
        %v1356 = vmul.f32 %v1187, %v1353
        %v1360 = vrot.slane %v1354, 3
        %v1361 = vrot.slane %v1355, 3
        %v1362 = vsel %vm281, %v1360, %v1361
        %v1363 = vrot.slane %v1356, 3
        %v1364 = vsel %vm281, %v1361, %v1363
        %1365 = vrot.lane.b32.xlu0 %v1362, 127
        %v1366 = vpop.permute.xlu0 %1365
        %1367 = vrot.lane.b32.xlu0 %v1364, 127
        %v1368 = vpop.permute.xlu0 %1367
        %v1371 = vadd.f32 %v1350, %v1366
        %v1372 = vadd.f32 %v1351, %v1368
        %s1373 = sld [smem:[#allocation3 + $0x4e]]
        %v1374 = vstv %s1373
        %v1375 = vmul.f32 %v1185, %v1374
        %v1376 = vmul.f32 %v1186, %v1374
        %v1377 = vmul.f32 %v1187, %v1374
        %v1381 = vrot.slane %v1375, 4
        %v1382 = vrot.slane %v1376, 4
        %v1383 = vsel %vm299, %v1381, %v1382
        %v1384 = vrot.slane %v1377, 4
        %v1385 = vsel %vm299, %v1382, %v1384
        %1386 = vrot.lane.b32.xlu0 %v1383, 127
        %v1387 = vpop.permute.xlu0 %1386
        %1388 = vrot.lane.b32.xlu0 %v1385, 127
        %v1389 = vpop.permute.xlu0 %1388
        %v1392 = vadd.f32 %v1371, %v1387
        %v1393 = vadd.f32 %v1372, %v1389
        %s1394 = sld [smem:[#allocation3 + $0x55]]
        %v1395 = vstv %s1394
        %v1396 = vmul.f32 %v1185, %v1395
        %v1397 = vmul.f32 %v1186, %v1395
        %v1398 = vmul.f32 %v1187, %v1395
        %v1402 = vrot.slane %v1396, 5
        %v1403 = vrot.slane %v1397, 5
        %v1404 = vsel %vm317, %v1402, %v1403
        %v1405 = vrot.slane %v1398, 5
        %v1406 = vsel %vm317, %v1403, %v1405
        %1407 = vrot.lane.b32.xlu0 %v1404, 127
        %v1408 = vpop.permute.xlu0 %1407
        %1409 = vrot.lane.b32.xlu0 %v1406, 127
        %v1410 = vpop.permute.xlu0 %1409
        %v1413 = vadd.f32 %v1392, %v1408
        %v1414 = vadd.f32 %v1393, %v1410
        %s1415 = sld [smem:[#allocation3 + $0x5c]]
        %v1416 = vstv %s1415
        %v1417 = vmul.f32 %v1185, %v1416
        %v1418 = vmul.f32 %v1186, %v1416
        %v1419 = vmul.f32 %v1187, %v1416
        %v1423 = vrot.slane %v1417, 6
        %v1424 = vrot.slane %v1418, 6
        %v1425 = vsel %vm335, %v1423, %v1424
        %v1426 = vrot.slane %v1419, 6
        %v1427 = vsel %vm335, %v1424, %v1426
        %1428 = vrot.lane.b32.xlu0 %v1425, 127
        %v1429 = vpop.permute.xlu0 %1428
        %1430 = vrot.lane.b32.xlu0 %v1427, 127
        %v1431 = vpop.permute.xlu0 %1430
        %v1434 = vadd.f32 %v1413, %v1429
        %v1435 = vadd.f32 %v1414, %v1431
        %s1436 = sld [smem:[#allocation3 + $0x33]]
        %v1437 = vstv %s1436
        %v1438 = vmul.f32 %v1185, %v1437
        %v1439 = vmul.f32 %v1186, %v1437
        %1442 = vrot.lane.b32.xlu0 %v1438, 126
        %v1443 = vpop.permute.xlu0 %1442
        %1444 = vrot.lane.b32.xlu0 %v1439, 126
        %v1445 = vpop.permute.xlu0 %1444
        %v1448 = vadd.f32 %v1434, %v1443
        %v1449 = vadd.f32 %v1435, %v1445
        %s1450 = sld [smem:[#allocation3 + $0x3a]]
        %v1451 = vstv %s1450
        %v1452 = vmul.f32 %v1185, %v1451
        %v1453 = vmul.f32 %v1186, %v1451
        %v1454 = vmul.f32 %v1187, %v1451
        %v1458 = vrot.slane %v1452, 1
        %v1459 = vrot.slane %v1453, 1
        %v1460 = vsel %vm245, %v1458, %v1459
        %v1461 = vrot.slane %v1454, 1
        %v1462 = vsel %vm245, %v1459, %v1461
        %1463 = vrot.lane.b32.xlu0 %v1460, 126
        %v1464 = vpop.permute.xlu0 %1463
        %1465 = vrot.lane.b32.xlu0 %v1462, 126
        %v1466 = vpop.permute.xlu0 %1465
        %v1469 = vadd.f32 %v1448, %v1464
        %v1470 = vadd.f32 %v1449, %v1466
        %s1471 = sld [smem:[#allocation3 + $0x41]]
        %v1472 = vstv %s1471
        %v1473 = vmul.f32 %v1185, %v1472
        %v1474 = vmul.f32 %v1186, %v1472
        %v1475 = vmul.f32 %v1187, %v1472
        %v1479 = vrot.slane %v1473, 2
        %v1480 = vrot.slane %v1474, 2
        %v1481 = vsel %vm263, %v1479, %v1480
        %v1482 = vrot.slane %v1475, 2
        %v1483 = vsel %vm263, %v1480, %v1482
        %1484 = vrot.lane.b32.xlu0 %v1481, 126
        %v1485 = vpop.permute.xlu0 %1484
        %1486 = vrot.lane.b32.xlu0 %v1483, 126
        %v1487 = vpop.permute.xlu0 %1486
        %v1490 = vadd.f32 %v1469, %v1485
        %v1491 = vadd.f32 %v1470, %v1487
        %s1492 = sld [smem:[#allocation3 + $0x48]]
        %v1493 = vstv %s1492
        %v1494 = vmul.f32 %v1185, %v1493
        %v1495 = vmul.f32 %v1186, %v1493
        %v1496 = vmul.f32 %v1187, %v1493
        %v1500 = vrot.slane %v1494, 3
        %v1501 = vrot.slane %v1495, 3
        %v1502 = vsel %vm281, %v1500, %v1501
        %v1503 = vrot.slane %v1496, 3
        %v1504 = vsel %vm281, %v1501, %v1503
        %1505 = vrot.lane.b32.xlu0 %v1502, 126
        %v1506 = vpop.permute.xlu0 %1505
        %1507 = vrot.lane.b32.xlu0 %v1504, 126
        %v1508 = vpop.permute.xlu0 %1507
        %v1511 = vadd.f32 %v1490, %v1506
        %v1512 = vadd.f32 %v1491, %v1508
        %s1513 = sld [smem:[#allocation3 + $0x4f]]
        %v1514 = vstv %s1513
        %v1515 = vmul.f32 %v1185, %v1514
        %v1516 = vmul.f32 %v1186, %v1514
        %v1517 = vmul.f32 %v1187, %v1514
        %v1521 = vrot.slane %v1515, 4
        %v1522 = vrot.slane %v1516, 4
        %v1523 = vsel %vm299, %v1521, %v1522
        %v1524 = vrot.slane %v1517, 4
        %v1525 = vsel %vm299, %v1522, %v1524
        %1526 = vrot.lane.b32.xlu0 %v1523, 126
        %v1527 = vpop.permute.xlu0 %1526
        %1528 = vrot.lane.b32.xlu0 %v1525, 126
        %v1529 = vpop.permute.xlu0 %1528
        %v1532 = vadd.f32 %v1511, %v1527
        %v1533 = vadd.f32 %v1512, %v1529
        %s1534 = sld [smem:[#allocation3 + $0x56]]
        %v1535 = vstv %s1534
        %v1536 = vmul.f32 %v1185, %v1535
        %v1537 = vmul.f32 %v1186, %v1535
        %v1538 = vmul.f32 %v1187, %v1535
        %v1542 = vrot.slane %v1536, 5
        %v1543 = vrot.slane %v1537, 5
        %v1544 = vsel %vm317, %v1542, %v1543
        %v1545 = vrot.slane %v1538, 5
        %v1546 = vsel %vm317, %v1543, %v1545
        %1547 = vrot.lane.b32.xlu0 %v1544, 126
        %v1548 = vpop.permute.xlu0 %1547
        %1549 = vrot.lane.b32.xlu0 %v1546, 126
        %v1550 = vpop.permute.xlu0 %1549
        %v1553 = vadd.f32 %v1532, %v1548
        %v1554 = vadd.f32 %v1533, %v1550
        %s1555 = sld [smem:[#allocation3 + $0x5d]]
        %v1556 = vstv %s1555
        %v1557 = vmul.f32 %v1185, %v1556
        %v1558 = vmul.f32 %v1186, %v1556
        %v1559 = vmul.f32 %v1187, %v1556
        %v1563 = vrot.slane %v1557, 6
        %v1564 = vrot.slane %v1558, 6
        %v1565 = vsel %vm335, %v1563, %v1564
        %v1566 = vrot.slane %v1559, 6
        %v1567 = vsel %vm335, %v1564, %v1566
        %1568 = vrot.lane.b32.xlu0 %v1565, 126
        %v1569 = vpop.permute.xlu0 %1568
        %1570 = vrot.lane.b32.xlu0 %v1567, 126
        %v1571 = vpop.permute.xlu0 %1570
        %v1574 = vadd.f32 %v1553, %v1569
        %v1575 = vadd.f32 %v1554, %v1571
        %s1576 = sld [smem:[#allocation3 + $0x34]]
        %v1577 = vstv %s1576
        %v1578 = vmul.f32 %v1185, %v1577
        %v1579 = vmul.f32 %v1186, %v1577
        %1582 = vrot.lane.b32.xlu0 %v1578, 125
        %v1583 = vpop.permute.xlu0 %1582
        %1584 = vrot.lane.b32.xlu0 %v1579, 125
        %v1585 = vpop.permute.xlu0 %1584
        %v1588 = vadd.f32 %v1574, %v1583
        %v1589 = vadd.f32 %v1575, %v1585
        %s1590 = sld [smem:[#allocation3 + $0x3b]]
        %v1591 = vstv %s1590
        %v1592 = vmul.f32 %v1185, %v1591
        %v1593 = vmul.f32 %v1186, %v1591
        %v1594 = vmul.f32 %v1187, %v1591
        %v1598 = vrot.slane %v1592, 1
        %v1599 = vrot.slane %v1593, 1
        %v1600 = vsel %vm245, %v1598, %v1599
        %v1601 = vrot.slane %v1594, 1
        %v1602 = vsel %vm245, %v1599, %v1601
        %1603 = vrot.lane.b32.xlu0 %v1600, 125
        %v1604 = vpop.permute.xlu0 %1603
        %1605 = vrot.lane.b32.xlu0 %v1602, 125
        %v1606 = vpop.permute.xlu0 %1605
        %v1609 = vadd.f32 %v1588, %v1604
        %v1610 = vadd.f32 %v1589, %v1606
        %s1611 = sld [smem:[#allocation3 + $0x42]]
        %v1612 = vstv %s1611
        %v1613 = vmul.f32 %v1185, %v1612
        %v1614 = vmul.f32 %v1186, %v1612
        %v1615 = vmul.f32 %v1187, %v1612
        %v1619 = vrot.slane %v1613, 2
        %v1620 = vrot.slane %v1614, 2
        %v1621 = vsel %vm263, %v1619, %v1620
        %v1622 = vrot.slane %v1615, 2
        %v1623 = vsel %vm263, %v1620, %v1622
        %1624 = vrot.lane.b32.xlu0 %v1621, 125
        %v1625 = vpop.permute.xlu0 %1624
        %1626 = vrot.lane.b32.xlu0 %v1623, 125
        %v1627 = vpop.permute.xlu0 %1626
        %v1630 = vadd.f32 %v1609, %v1625
        %v1631 = vadd.f32 %v1610, %v1627
        %s1632 = sld [smem:[#allocation3 + $0x49]]
        %v1633 = vstv %s1632
        %v1634 = vmul.f32 %v1185, %v1633
        %v1635 = vmul.f32 %v1186, %v1633
        %v1636 = vmul.f32 %v1187, %v1633
        %v1640 = vrot.slane %v1634, 3
        %v1641 = vrot.slane %v1635, 3
        %v1642 = vsel %vm281, %v1640, %v1641
        %v1643 = vrot.slane %v1636, 3
        %v1644 = vsel %vm281, %v1641, %v1643
        %1645 = vrot.lane.b32.xlu0 %v1642, 125
        %v1646 = vpop.permute.xlu0 %1645
        %1647 = vrot.lane.b32.xlu0 %v1644, 125
        %v1648 = vpop.permute.xlu0 %1647
        %v1651 = vadd.f32 %v1630, %v1646
        %v1652 = vadd.f32 %v1631, %v1648
        %s1653 = sld [smem:[#allocation3 + $0x50]]
        %v1654 = vstv %s1653
        %v1655 = vmul.f32 %v1185, %v1654
        %v1656 = vmul.f32 %v1186, %v1654
        %v1657 = vmul.f32 %v1187, %v1654
        %v1661 = vrot.slane %v1655, 4
        %v1662 = vrot.slane %v1656, 4
        %v1663 = vsel %vm299, %v1661, %v1662
        %v1664 = vrot.slane %v1657, 4
        %v1665 = vsel %vm299, %v1662, %v1664
        %1666 = vrot.lane.b32.xlu0 %v1663, 125
        %v1667 = vpop.permute.xlu0 %1666
        %1668 = vrot.lane.b32.xlu0 %v1665, 125
        %v1669 = vpop.permute.xlu0 %1668
        %v1672 = vadd.f32 %v1651, %v1667
        %v1673 = vadd.f32 %v1652, %v1669
        %s1674 = sld [smem:[#allocation3 + $0x57]]
        %v1675 = vstv %s1674
        %v1676 = vmul.f32 %v1185, %v1675
        %v1677 = vmul.f32 %v1186, %v1675
        %v1678 = vmul.f32 %v1187, %v1675
        %v1682 = vrot.slane %v1676, 5
        %v1683 = vrot.slane %v1677, 5
        %v1684 = vsel %vm317, %v1682, %v1683
        %v1685 = vrot.slane %v1678, 5
        %v1686 = vsel %vm317, %v1683, %v1685
        %1687 = vrot.lane.b32.xlu0 %v1684, 125
        %v1688 = vpop.permute.xlu0 %1687
        %1689 = vrot.lane.b32.xlu0 %v1686, 125
        %v1690 = vpop.permute.xlu0 %1689
        %v1693 = vadd.f32 %v1672, %v1688
        %v1694 = vadd.f32 %v1673, %v1690
        %s1695 = sld [smem:[#allocation3 + $0x5e]]
        %v1696 = vstv %s1695
        %v1697 = vmul.f32 %v1185, %v1696
        %v1698 = vmul.f32 %v1186, %v1696
        %v1699 = vmul.f32 %v1187, %v1696
        %v1703 = vrot.slane %v1697, 6
        %v1704 = vrot.slane %v1698, 6
        %v1705 = vsel %vm335, %v1703, %v1704
        %v1706 = vrot.slane %v1699, 6
        %v1707 = vsel %vm335, %v1704, %v1706
        %1708 = vrot.lane.b32.xlu0 %v1705, 125
        %v1709 = vpop.permute.xlu0 %1708
        %1710 = vrot.lane.b32.xlu0 %v1707, 125
        %v1711 = vpop.permute.xlu0 %1710
        %v1714 = vadd.f32 %v1693, %v1709
        %v1715 = vadd.f32 %v1694, %v1711
        %s1716 = sld [smem:[#allocation3 + $0x35]]
        %v1717 = vstv %s1716
        %v1718 = vmul.f32 %v1185, %v1717
        %v1719 = vmul.f32 %v1186, %v1717
        %1722 = vrot.lane.b32.xlu0 %v1718, 124
        %v1723 = vpop.permute.xlu0 %1722
        %1724 = vrot.lane.b32.xlu0 %v1719, 124
        %v1725 = vpop.permute.xlu0 %1724
        %v1728 = vadd.f32 %v1714, %v1723
        %v1729 = vadd.f32 %v1715, %v1725
        %s1730 = sld [smem:[#allocation3 + $0x3c]]
        %v1731 = vstv %s1730
        %v1732 = vmul.f32 %v1185, %v1731
        %v1733 = vmul.f32 %v1186, %v1731
        %v1734 = vmul.f32 %v1187, %v1731
        %v1738 = vrot.slane %v1732, 1
        %v1739 = vrot.slane %v1733, 1
        %v1740 = vsel %vm245, %v1738, %v1739
        %v1741 = vrot.slane %v1734, 1
        %v1742 = vsel %vm245, %v1739, %v1741
        %1743 = vrot.lane.b32.xlu0 %v1740, 124
        %v1744 = vpop.permute.xlu0 %1743
        %1745 = vrot.lane.b32.xlu0 %v1742, 124
        %v1746 = vpop.permute.xlu0 %1745
        %v1749 = vadd.f32 %v1728, %v1744
        %v1750 = vadd.f32 %v1729, %v1746
        %s1751 = sld [smem:[#allocation3 + $0x43]]
        %v1752 = vstv %s1751
        %v1753 = vmul.f32 %v1185, %v1752
        %v1754 = vmul.f32 %v1186, %v1752
        %v1755 = vmul.f32 %v1187, %v1752
        %v1759 = vrot.slane %v1753, 2
        %v1760 = vrot.slane %v1754, 2
        %v1761 = vsel %vm263, %v1759, %v1760
        %v1762 = vrot.slane %v1755, 2
        %v1763 = vsel %vm263, %v1760, %v1762
        %1764 = vrot.lane.b32.xlu0 %v1761, 124
        %v1765 = vpop.permute.xlu0 %1764
        %1766 = vrot.lane.b32.xlu0 %v1763, 124
        %v1767 = vpop.permute.xlu0 %1766
        %v1770 = vadd.f32 %v1749, %v1765
        %v1771 = vadd.f32 %v1750, %v1767
        %s1772 = sld [smem:[#allocation3 + $0x4a]]
        %v1773 = vstv %s1772
        %v1774 = vmul.f32 %v1185, %v1773
        %v1775 = vmul.f32 %v1186, %v1773
        %v1776 = vmul.f32 %v1187, %v1773
        %v1780 = vrot.slane %v1774, 3
        %v1781 = vrot.slane %v1775, 3
        %v1782 = vsel %vm281, %v1780, %v1781
        %v1783 = vrot.slane %v1776, 3
        %v1784 = vsel %vm281, %v1781, %v1783
        %1785 = vrot.lane.b32.xlu0 %v1782, 124
        %v1786 = vpop.permute.xlu0 %1785
        %1787 = vrot.lane.b32.xlu0 %v1784, 124
        %v1788 = vpop.permute.xlu0 %1787
        %v1791 = vadd.f32 %v1770, %v1786
        %v1792 = vadd.f32 %v1771, %v1788
        %s1793 = sld [smem:[#allocation3 + $0x51]]
        %v1794 = vstv %s1793
        %v1795 = vmul.f32 %v1185, %v1794
        %v1796 = vmul.f32 %v1186, %v1794
        %v1797 = vmul.f32 %v1187, %v1794
        %v1801 = vrot.slane %v1795, 4
        %v1802 = vrot.slane %v1796, 4
        %v1803 = vsel %vm299, %v1801, %v1802
        %v1804 = vrot.slane %v1797, 4
        %v1805 = vsel %vm299, %v1802, %v1804
        %1806 = vrot.lane.b32.xlu0 %v1803, 124
        %v1807 = vpop.permute.xlu0 %1806
        %1808 = vrot.lane.b32.xlu0 %v1805, 124
        %v1809 = vpop.permute.xlu0 %1808
        %v1812 = vadd.f32 %v1791, %v1807
        %v1813 = vadd.f32 %v1792, %v1809
        %s1814 = sld [smem:[#allocation3 + $0x58]]
        %v1815 = vstv %s1814
        %v1816 = vmul.f32 %v1185, %v1815
        %v1817 = vmul.f32 %v1186, %v1815
        %v1818 = vmul.f32 %v1187, %v1815
        %v1822 = vrot.slane %v1816, 5
        %v1823 = vrot.slane %v1817, 5
        %v1824 = vsel %vm317, %v1822, %v1823
        %v1825 = vrot.slane %v1818, 5
        %v1826 = vsel %vm317, %v1823, %v1825
        %1827 = vrot.lane.b32.xlu0 %v1824, 124
        %v1828 = vpop.permute.xlu0 %1827
        %1829 = vrot.lane.b32.xlu0 %v1826, 124
        %v1830 = vpop.permute.xlu0 %1829
        %v1833 = vadd.f32 %v1812, %v1828
        %v1834 = vadd.f32 %v1813, %v1830
        %s1835 = sld [smem:[#allocation3 + $0x5f]]
        %v1836 = vstv %s1835
        %v1837 = vmul.f32 %v1185, %v1836
        %v1838 = vmul.f32 %v1186, %v1836
        %v1839 = vmul.f32 %v1187, %v1836
        %v1843 = vrot.slane %v1837, 6
        %v1844 = vrot.slane %v1838, 6
        %v1845 = vsel %vm335, %v1843, %v1844
        %v1846 = vrot.slane %v1839, 6
        %v1847 = vsel %vm335, %v1844, %v1846
        %1848 = vrot.lane.b32.xlu0 %v1845, 124
        %v1849 = vpop.permute.xlu0 %1848
        %1850 = vrot.lane.b32.xlu0 %v1847, 124
        %v1851 = vpop.permute.xlu0 %1850
        %v1854 = vadd.f32 %v1833, %v1849
        %v1855 = vadd.f32 %v1834, %v1851
        %s1856 = sld [smem:[#allocation3 + $0x36]]
        %v1857 = vstv %s1856
        %v1858 = vmul.f32 %v1185, %v1857
        %v1859 = vmul.f32 %v1186, %v1857
        %1862 = vrot.lane.b32.xlu0 %v1858, 123
        %v1863 = vpop.permute.xlu0 %1862
        %1864 = vrot.lane.b32.xlu0 %v1859, 123
        %v1865 = vpop.permute.xlu0 %1864
        %v1868 = vadd.f32 %v1854, %v1863
        %v1869 = vadd.f32 %v1855, %v1865
        %s1870 = sld [smem:[#allocation3 + $0x3d]]
        %v1871 = vstv %s1870
        %v1872 = vmul.f32 %v1185, %v1871
        %v1873 = vmul.f32 %v1186, %v1871
        %v1874 = vmul.f32 %v1187, %v1871
        %v1878 = vrot.slane %v1872, 1
        %v1879 = vrot.slane %v1873, 1
        %v1880 = vsel %vm245, %v1878, %v1879
        %v1881 = vrot.slane %v1874, 1
        %v1882 = vsel %vm245, %v1879, %v1881
        %1883 = vrot.lane.b32.xlu0 %v1880, 123
        %v1884 = vpop.permute.xlu0 %1883
        %1885 = vrot.lane.b32.xlu0 %v1882, 123
        %v1886 = vpop.permute.xlu0 %1885
        %v1889 = vadd.f32 %v1868, %v1884
        %v1890 = vadd.f32 %v1869, %v1886
        %s1891 = sld [smem:[#allocation3 + $0x44]]
        %v1892 = vstv %s1891
        %v1893 = vmul.f32 %v1185, %v1892
        %v1894 = vmul.f32 %v1186, %v1892
        %v1895 = vmul.f32 %v1187, %v1892
        %v1899 = vrot.slane %v1893, 2
        %v1900 = vrot.slane %v1894, 2
        %v1901 = vsel %vm263, %v1899, %v1900
        %v1902 = vrot.slane %v1895, 2
        %v1903 = vsel %vm263, %v1900, %v1902
        %1904 = vrot.lane.b32.xlu0 %v1901, 123
        %v1905 = vpop.permute.xlu0 %1904
        %1906 = vrot.lane.b32.xlu0 %v1903, 123
        %v1907 = vpop.permute.xlu0 %1906
        %v1910 = vadd.f32 %v1889, %v1905
        %v1911 = vadd.f32 %v1890, %v1907
        %s1912 = sld [smem:[#allocation3 + $0x4b]]
        %v1913 = vstv %s1912
        %v1914 = vmul.f32 %v1185, %v1913
        %v1915 = vmul.f32 %v1186, %v1913
        %v1916 = vmul.f32 %v1187, %v1913
        %v1920 = vrot.slane %v1914, 3
        %v1921 = vrot.slane %v1915, 3
        %v1922 = vsel %vm281, %v1920, %v1921
        %v1923 = vrot.slane %v1916, 3
        %v1924 = vsel %vm281, %v1921, %v1923
        %1925 = vrot.lane.b32.xlu0 %v1922, 123
        %v1926 = vpop.permute.xlu0 %1925
        %1927 = vrot.lane.b32.xlu0 %v1924, 123
        %v1928 = vpop.permute.xlu0 %1927
        %v1931 = vadd.f32 %v1910, %v1926
        %v1932 = vadd.f32 %v1911, %v1928
        %s1933 = sld [smem:[#allocation3 + $0x52]]
        %v1934 = vstv %s1933
        %v1935 = vmul.f32 %v1185, %v1934
        %v1936 = vmul.f32 %v1186, %v1934
        %v1937 = vmul.f32 %v1187, %v1934
        %v1941 = vrot.slane %v1935, 4
        %v1942 = vrot.slane %v1936, 4
        %v1943 = vsel %vm299, %v1941, %v1942
        %v1944 = vrot.slane %v1937, 4
        %v1945 = vsel %vm299, %v1942, %v1944
        %1946 = vrot.lane.b32.xlu0 %v1943, 123
        %v1947 = vpop.permute.xlu0 %1946
        %1948 = vrot.lane.b32.xlu0 %v1945, 123
        %v1949 = vpop.permute.xlu0 %1948
        %v1952 = vadd.f32 %v1931, %v1947
        %v1953 = vadd.f32 %v1932, %v1949
        %s1954 = sld [smem:[#allocation3 + $0x59]]
        %v1955 = vstv %s1954
        %v1956 = vmul.f32 %v1185, %v1955
        %v1957 = vmul.f32 %v1186, %v1955
        %v1958 = vmul.f32 %v1187, %v1955
        %v1962 = vrot.slane %v1956, 5
        %v1963 = vrot.slane %v1957, 5
        %v1964 = vsel %vm317, %v1962, %v1963
        %v1965 = vrot.slane %v1958, 5
        %v1966 = vsel %vm317, %v1963, %v1965
        %1967 = vrot.lane.b32.xlu0 %v1964, 123
        %v1968 = vpop.permute.xlu0 %1967
        %1969 = vrot.lane.b32.xlu0 %v1966, 123
        %v1970 = vpop.permute.xlu0 %1969
        %v1973 = vadd.f32 %v1952, %v1968
        %v1974 = vadd.f32 %v1953, %v1970
        %s1975 = sld [smem:[#allocation3 + $0x60]]
        %v1976 = vstv %s1975
        %v1977 = vmul.f32 %v1185, %v1976
        %v1978 = vmul.f32 %v1186, %v1976
        %v1979 = vmul.f32 %v1187, %v1976
        %v1983 = vrot.slane %v1977, 6
        %v1984 = vrot.slane %v1978, 6
        %v1985 = vsel %vm335, %v1983, %v1984
        %v1986 = vrot.slane %v1979, 6
        %v1987 = vsel %vm335, %v1984, %v1986
        %1988 = vrot.lane.b32.xlu0 %v1985, 123
        %v1989 = vpop.permute.xlu0 %1988
        %1990 = vrot.lane.b32.xlu0 %v1987, 123
        %v1991 = vpop.permute.xlu0 %1990
        %v1994 = vadd.f32 %v1973, %v1989
        %v1995 = vadd.f32 %v1974, %v1991
        %s1996 = sld [smem:[#allocation3 + $0x37]]
        %v1997 = vstv %s1996
        %v1998 = vmul.f32 %v1185, %v1997
        %v1999 = vmul.f32 %v1186, %v1997
        %2002 = vrot.lane.b32.xlu0 %v1998, 122
        %v2003 = vpop.permute.xlu0 %2002
        %2004 = vrot.lane.b32.xlu0 %v1999, 122
        %v2005 = vpop.permute.xlu0 %2004
        %v2008 = vadd.f32 %v1994, %v2003
        %v2009 = vadd.f32 %v1995, %v2005
        %s2010 = sld [smem:[#allocation3 + $0x3e]]
        %v2011 = vstv %s2010
        %v2012 = vmul.f32 %v1185, %v2011
        %v2013 = vmul.f32 %v1186, %v2011
        %v2014 = vmul.f32 %v1187, %v2011
        %v2018 = vrot.slane %v2012, 1
        %v2019 = vrot.slane %v2013, 1
        %v2020 = vsel %vm245, %v2018, %v2019
        %v2021 = vrot.slane %v2014, 1
        %v2022 = vsel %vm245, %v2019, %v2021
        %2023 = vrot.lane.b32.xlu0 %v2020, 122
        %v2024 = vpop.permute.xlu0 %2023
        %2025 = vrot.lane.b32.xlu0 %v2022, 122
        %v2026 = vpop.permute.xlu0 %2025
        %v2029 = vadd.f32 %v2008, %v2024
        %v2030 = vadd.f32 %v2009, %v2026
        %s2031 = sld [smem:[#allocation3 + $0x45]]
        %v2032 = vstv %s2031
        %v2033 = vmul.f32 %v1185, %v2032
        %v2034 = vmul.f32 %v1186, %v2032
        %v2035 = vmul.f32 %v1187, %v2032
        %v2039 = vrot.slane %v2033, 2
        %v2040 = vrot.slane %v2034, 2
        %v2041 = vsel %vm263, %v2039, %v2040
        %v2042 = vrot.slane %v2035, 2
        %v2043 = vsel %vm263, %v2040, %v2042
        %2044 = vrot.lane.b32.xlu0 %v2041, 122
        %v2045 = vpop.permute.xlu0 %2044
        %2046 = vrot.lane.b32.xlu0 %v2043, 122
        %v2047 = vpop.permute.xlu0 %2046
        %v2050 = vadd.f32 %v2029, %v2045
        %v2051 = vadd.f32 %v2030, %v2047
        %s2052 = sld [smem:[#allocation3 + $0x4c]]
        %v2053 = vstv %s2052
        %v2054 = vmul.f32 %v1185, %v2053
        %v2055 = vmul.f32 %v1186, %v2053
        %v2056 = vmul.f32 %v1187, %v2053
        %v2060 = vrot.slane %v2054, 3
        %v2061 = vrot.slane %v2055, 3
        %v2062 = vsel %vm281, %v2060, %v2061
        %v2063 = vrot.slane %v2056, 3
        %v2064 = vsel %vm281, %v2061, %v2063
        %2065 = vrot.lane.b32.xlu0 %v2062, 122
        %v2066 = vpop.permute.xlu0 %2065
        %2067 = vrot.lane.b32.xlu0 %v2064, 122
        %v2068 = vpop.permute.xlu0 %2067
        %v2071 = vadd.f32 %v2050, %v2066
        %v2072 = vadd.f32 %v2051, %v2068
        %s2073 = sld [smem:[#allocation3 + $0x53]]
        %v2074 = vstv %s2073
        %v2075 = vmul.f32 %v1185, %v2074
        %v2076 = vmul.f32 %v1186, %v2074
        %v2077 = vmul.f32 %v1187, %v2074
        %v2081 = vrot.slane %v2075, 4
        %v2082 = vrot.slane %v2076, 4
        %v2083 = vsel %vm299, %v2081, %v2082
        %v2084 = vrot.slane %v2077, 4
        %v2085 = vsel %vm299, %v2082, %v2084
        %2086 = vrot.lane.b32.xlu0 %v2083, 122
        %v2087 = vpop.permute.xlu0 %2086
        %2088 = vrot.lane.b32.xlu0 %v2085, 122
        %v2089 = vpop.permute.xlu0 %2088
        %v2092 = vadd.f32 %v2071, %v2087
        %v2093 = vadd.f32 %v2072, %v2089
        %s2094 = sld [smem:[#allocation3 + $0x5a]]
        %v2095 = vstv %s2094
        %v2096 = vmul.f32 %v1185, %v2095
        %v2097 = vmul.f32 %v1186, %v2095
        %v2098 = vmul.f32 %v1187, %v2095
        %v2102 = vrot.slane %v2096, 5
        %v2103 = vrot.slane %v2097, 5
        %v2104 = vsel %vm317, %v2102, %v2103
        %v2105 = vrot.slane %v2098, 5
        %v2106 = vsel %vm317, %v2103, %v2105
        %2107 = vrot.lane.b32.xlu0 %v2104, 122
        %v2108 = vpop.permute.xlu0 %2107
        %2109 = vrot.lane.b32.xlu0 %v2106, 122
        %v2110 = vpop.permute.xlu0 %2109
        %v2113 = vadd.f32 %v2092, %v2108
        %v2114 = vadd.f32 %v2093, %v2110
        %s2115 = sld [smem:[#allocation3 + $0x61]]
        %v2116 = vstv %s2115
        %v2117 = vmul.f32 %v1185, %v2116
        %v2118 = vmul.f32 %v1186, %v2116
        %v2119 = vmul.f32 %v1187, %v2116
        %v2123 = vrot.slane %v2117, 6
        %v2124 = vrot.slane %v2118, 6
        %v2125 = vsel %vm335, %v2123, %v2124
        %v2126 = vrot.slane %v2119, 6
        %v2127 = vsel %vm335, %v2124, %v2126
        %2128 = vrot.lane.b32.xlu0 %v2125, 122
        %v2129 = vpop.permute.xlu0 %2128
        %2130 = vrot.lane.b32.xlu0 %v2127, 122
        %v2131 = vpop.permute.xlu0 %2130
        %v2134 = vadd.f32 %v2113, %v2129
        %v2135 = vadd.f32 %v2114, %v2131
        %v2136 = vsub.f32 0.0, %v2134
        %v2137 = vsub.f32 0.0, %v2135
        %v2138 = vmul.f32 %v2136, 1.442695
        %v2139 = vpow.pop %v2138
        %v2140 = vmul.f32 %v2137, 1.442695
        %v2141 = vpow.pop %v2140
        %v2142 = vadd.f32 %v2139, 1.0
        %v2143 = vadd.f32 %v2141, 1.0
        %v2144 = vrcp.pop %v2142
        %v2145 = vmul.f32 1.0, %v2144
        %v2146 = vrcp.pop %v2143
        %v2147 = vmul.f32 1.0, %v2146
        %vm2148 = vcmask 130048
        %2149 = vst.msk [vmem:[%s175] sm:$0xff] %vm2148, %v2145
        %2150 = vst.msk [vmem:[%s175 + $0x8] sm:$0xff] %vm2148, %v2147
        %s2151 = sand.u32 %s75, 1
        %s2152 = scalar_lea.sflag [#allocation5], %s2151
        %s2153 = sand.u32 %s75, 1
        %s2154 = smul.addr %s2153, 16
        %s2155 = scalar_lea.vmem [#allocation8], %s2154
        // Predicated region
        $region37: #{spatial_attention.1} parent=27 // pred_check
          %p2156 = pneg %p85
        $region38: #{spatial_attention.1} parent=27 // pred_check_branch
          %2158 = sbr.rel (%p2156) target = $region40
        $region39: #{spatial_attention.1} parent=27 // pred_region
          %s2160 = ssub.s32 256, 256
          %2161 = vsyncadd %s2152, %s2160
          %s2162 = smul.addr %s20, 2
          %s2163 = smul.addr %s2162, 128
          %s2164 = scalar_lea.hbm %s2, %s2163
          %s2165 = sshll.u32 %s2155, 4
          %s2166 = int_to_ptr.vmem [resolvable:$true] %s2165
          %2171 = dma.vmem_to_hbm [thread:$0]  %s2166, 256, %s2164, %s2152, 128, 128, 8
        $region40: #{spatial_attention.1} parent=27 // pred_fallthru
          _
      $region28: #{spatial_attention.1} parent=5 // pred_fallthru
        _
      %p2172 = scmp.le.s32.totalorder 2, %s15
      // Predicated region
      $region41: #{spatial_attention.1} parent=5 // pred_check
        %p2173 = pneg %p2172
      $region42: #{spatial_attention.1} parent=5 // pred_check_branch
        %2175 = sbr.rel (%p2173) target = $region44
      $region43: #{spatial_attention.1} parent=5 // pred_region
        %s2176 = ssub.s32 %s15, 2
        // Predicated region
        $region45: #{spatial_attention.1} parent=43 // pred_check
          %p2177 = pneg %p91
        $region46: #{spatial_attention.1} parent=43 // pred_check_branch
          %2179 = sbr.rel (%p2177) target = $region48
        $region47: #{spatial_attention.1} parent=43 // pred_region
          %s2180 = sand.u32 %s76, 1
          %s2181 = scalar_lea.sflag [#allocation5], %s2180
          %s2182 = sand.u32 %s76, 1
          %s2183 = smul.addr %s2182, 16
          %s2184 = scalar_lea.vmem [#allocation8], %s2183
          %2185 = dma.done %s2181, 256
        $region48: #{spatial_attention.1} parent=43 // pred_fallthru
          _
      $region44: #{spatial_attention.1} parent=5 // pred_fallthru
        _
    $region6: #{spatial_attention.1} parent=1 // loop_footer
      %s19 = sadd.s32 1, %s15
    $region7: #{spatial_attention.1} parent=1 // loop_footer_branch
      %14 = sbr.rel target = $region3
    $region8: #{spatial_attention.1} parent=1 // loop_exit
      _
    %2186 = vsyncpa [#allocation4], 1
    %s2187 = scalar_lea.sflag [#allocation4], 1
    %2188 = vsyncpa %s2187, 1
    %2189 = vsyncpa [#allocation5], 1
    %s2190 = scalar_lea.sflag [#allocation5], 1
    %2191 = vsyncpa %s2190, 1
    %2192 = vsyncpa [#allocation6], 1
    %s2193 = scalar_lea.sflag [#allocation6], 1
    %2194 = vsyncpa %s2193, 1

</llo_original>
